<compile_context>
chip_gen: v7x
topology: tpu7x:2x2x1
jax: 0.10.0
libtpu: 0.0.40
codegen_flags: <defaults>
</compile_context>

<pallas_src>
import jax
import jax.numpy as jnp
from jax.experimental import pallas as pl
from jax.experimental.pallas import tpu as pltpu

CIN, COUT, KH, KW = 3, 6, 3, 3


def _conv2d_direct_kernel(x_ref, w_ref, b_ref, o_ref):
    """One batch image per grid step; fully unrolled 3x3, 3->6 channels on the VPU.

    x_ref: (1, CIN, H, W)      VMEM, input dtype (upcast after load)
    w_ref: (COUT*CIN*KH*KW,)   SMEM, f32, PyTorch OIHW order flattened
    b_ref: (COUT,)             SMEM, f32
    o_ref: (1, COUT, H, W)     VMEM, f32 padded output; valid region is
                               [:, :, :H-2, :W-2] (cropped by the wrapper).
    """
    _, _, h, w = x_ref.shape

    # Hoist every scalar load out of the compute loops.
    wv = [[[[w_ref[((co * CIN + ci) * KH + kh) * KW + kw]
             for kw in range(KW)]
            for kh in range(KH)]
           for ci in range(CIN)]
          for co in range(COUT)]
    bv = [b_ref[co] for co in range(COUT)]

    # One full-(H, W) f32 accumulator per output channel, seeded with its bias.
    # At tile (16,16) this is ~20 live vregs total -> no spill pressure.
    accs = [jnp.full((h, w), bv[co], jnp.float32) for co in range(COUT)]

    # Direct conv, fully unrolled.  Shifted taps come from pltpu.roll on the
    # (idle) XLU instead of unaligned slices; the wrap-around rows/columns only
    # touch the pad region that is cropped outside the kernel.
    for ci in range(CIN):
        plane = x_ref[0, ci, :, :].astype(jnp.float32)          # (H, W), 1 load
        for kh in range(KH):
            rows = plane if kh == 0 else pltpu.roll(plane, shift=h - kh, axis=0)
            for kw in range(KW):
                patch = rows if kw == 0 else pltpu.roll(rows, shift=w - kw, axis=1)
                for co in range(COUT):
                    accs[co] = accs[co] + wv[co][ci][kh][kw] * patch

    for co in range(COUT):
        o_ref[0, co, :, :] = accs[co]   # full-width, unmasked store


def conv2d_pallas(x, weight, bias):
    """x: (N, 3, H, W), weight: (6, 3, 3, 3) OIHW, bias: (6,) -> (N, 6, H-2, W-2) f32."""
    n, cin, h, w = x.shape
    assert cin == CIN and weight.shape == (COUT, CIN, KH, KW)
    oh, ow = h - KH + 1, w - KW + 1

    w_flat = weight.reshape(-1).astype(jnp.float32)
    b32 = bias.astype(jnp.float32)

    flops = 2 * n * COUT * CIN * KH * KW * oh * ow
    bytes_accessed = (x.size * x.dtype.itemsize          # input
                      + w_flat.size * 4 + COUT * 4       # params
                      + n * COUT * h * w * 4)            # padded output

    # TODO(synk): for large H/W (e.g. 3x512x512) add an H-row tile grid axis with
    # a 2-row halo so each (input block + 6-channel output block) x 2 buffers
    # stays within v7x's 64 MiB physical / 32 MiB scoped VMEM budget.
    y_padded = pl.pallas_call(
        _conv2d_direct_kernel,
        out_shape=jax.ShapeDtypeStruct((n, COUT, h, w), jnp.float32),
        grid=(n,),
        in_specs=[
            pl.BlockSpec((1, CIN, h, w), lambda i: (i, 0, 0, 0)),   # x, pipelined
            pl.BlockSpec(memory_space=pltpu.MemorySpace.SMEM),      # weights
            pl.BlockSpec(memory_space=pltpu.MemorySpace.SMEM),      # bias
        ],
        out_specs=pl.BlockSpec((1, COUT, h, w), lambda i: (i, 0, 0, 0)),
        compiler_params=pltpu.CompilerParams(
            dimension_semantics=("parallel",)),
        cost_estimate=pl.CostEstimate(
            flops=flops, transcendentals=0, bytes_accessed=bytes_accessed),
    )(x, w_flat, b32)

    # Crop the lane/sublane padding (H, W) -> (OH, OW) outside the kernel so all
    # in-kernel stores stay lane-dense.
    return y_padded[:, :, :oh, :ow]


if __name__ == "__main__":
    key = jax.random.PRNGKey(0)
    kx, kw_, kb = jax.random.split(key, 3)

    # PyTorch-like default init: U(-1/sqrt(fan_in), 1/sqrt(fan_in)), fan_in = 3*3*3.
    fan_in = CIN * KH * KW
    bound = 1.0 / (fan_in ** 0.5)
    weight = jax.random.uniform(kw_, (COUT, CIN, KH, KW), jnp.float32, -bound, bound)
    bias = jax.random.uniform(kb, (COUT,), jnp.float32, -bound, bound)

    x = jax.random.normal(kx, (2, CIN, 16, 16), jnp.float32)

    y = conv2d_pallas(x, weight, bias)
    y = jax.block_until_ready(y)

    # Reference: XLA convolution with identical semantics.
    y_ref = jax.lax.conv_general_dilated(
        x, weight, window_strides=(1, 1), padding="VALID",
        dimension_numbers=("NCHW", "OIHW", "NCHW"),
        precision=jax.lax.Precision.HIGHEST,
    ) + bias[None, :, None, None]

    assert y.shape == (2, COUT, 14, 14), y.shape
    err = float(jnp.max(jnp.abs(y - y_ref)))
    assert jnp.allclose(y, y_ref, atol=1e-4, rtol=1e-4), err

    print("KERNEL_OK")
</pallas_src>

<mosaic_0001>
module attributes {stable_mosaic.version = 11 : i64} {
  func.func @_conv2d_direct_kernel(%arg0: i32, %arg1: memref<1x3x16x16xf32, #tpu.memory_space<vmem>>, %arg2: memref<162xf32, #tpu.memory_space<smem>>, %arg3: memref<6xf32, #tpu.memory_space<smem>>, %arg4: memref<1x6x16x16xf32, #tpu.memory_space<vmem>>) attributes {dimension_semantics = [#tpu.dimension_semantics<parallel>], iteration_bounds = array<i64: 2>, scalar_prefetch = 0 : i64, scratch_operands = 0 : i64, tpu.core_type = #tpu.core_type<tc>, window_params = [{transform_indices = @transform_0, window_bounds = array<i64: 1, 3, 16, 16>}, {transform_indices = @transform_1, window_bounds = array<i64: 162>}, {transform_indices = @transform_2, window_bounds = array<i64: 6>}, {transform_indices = @transform_3, window_bounds = array<i64: 1, 6, 16, 16>}]} {
    %c0 = arith.constant 0 : index
    %0 = memref.load %arg2[%c0] : memref<162xf32, #tpu.memory_space<smem>>
    %c1 = arith.constant 1 : index
    %1 = memref.load %arg2[%c1] : memref<162xf32, #tpu.memory_space<smem>>
    %c2 = arith.constant 2 : index
    %2 = memref.load %arg2[%c2] : memref<162xf32, #tpu.memory_space<smem>>
    %c3 = arith.constant 3 : index
    %3 = memref.load %arg2[%c3] : memref<162xf32, #tpu.memory_space<smem>>
    %c4 = arith.constant 4 : index
    %4 = memref.load %arg2[%c4] : memref<162xf32, #tpu.memory_space<smem>>
    %c5 = arith.constant 5 : index
    %5 = memref.load %arg2[%c5] : memref<162xf32, #tpu.memory_space<smem>>
    %c6 = arith.constant 6 : index
    %6 = memref.load %arg2[%c6] : memref<162xf32, #tpu.memory_space<smem>>
    %c7 = arith.constant 7 : index
    %7 = memref.load %arg2[%c7] : memref<162xf32, #tpu.memory_space<smem>>
    %c8 = arith.constant 8 : index
    %8 = memref.load %arg2[%c8] : memref<162xf32, #tpu.memory_space<smem>>
    %c9 = arith.constant 9 : index
    %9 = memref.load %arg2[%c9] : memref<162xf32, #tpu.memory_space<smem>>
    %c10 = arith.constant 10 : index
    %10 = memref.load %arg2[%c10] : memref<162xf32, #tpu.memory_space<smem>>
    %c11 = arith.constant 11 : index
    %11 = memref.load %arg2[%c11] : memref<162xf32, #tpu.memory_space<smem>>
    %c12 = arith.constant 12 : index
    %12 = memref.load %arg2[%c12] : memref<162xf32, #tpu.memory_space<smem>>
    %c13 = arith.constant 13 : index
    %13 = memref.load %arg2[%c13] : memref<162xf32, #tpu.memory_space<smem>>
    %c14 = arith.constant 14 : index
    %14 = memref.load %arg2[%c14] : memref<162xf32, #tpu.memory_space<smem>>
    %c15 = arith.constant 15 : index
    %15 = memref.load %arg2[%c15] : memref<162xf32, #tpu.memory_space<smem>>
    %c16 = arith.constant 16 : index
    %16 = memref.load %arg2[%c16] : memref<162xf32, #tpu.memory_space<smem>>
    %c17 = arith.constant 17 : index
    %17 = memref.load %arg2[%c17] : memref<162xf32, #tpu.memory_space<smem>>
    %c18 = arith.constant 18 : index
    %18 = memref.load %arg2[%c18] : memref<162xf32, #tpu.memory_space<smem>>
    %c19 = arith.constant 19 : index
    %19 = memref.load %arg2[%c19] : memref<162xf32, #tpu.memory_space<smem>>
    %c20 = arith.constant 20 : index
    %20 = memref.load %arg2[%c20] : memref<162xf32, #tpu.memory_space<smem>>
    %c21 = arith.constant 21 : index
    %21 = memref.load %arg2[%c21] : memref<162xf32, #tpu.memory_space<smem>>
    %c22 = arith.constant 22 : index
    %22 = memref.load %arg2[%c22] : memref<162xf32, #tpu.memory_space<smem>>
    %c23 = arith.constant 23 : index
    %23 = memref.load %arg2[%c23] : memref<162xf32, #tpu.memory_space<smem>>
    %c24 = arith.constant 24 : index
    %24 = memref.load %arg2[%c24] : memref<162xf32, #tpu.memory_space<smem>>
    %c25 = arith.constant 25 : index
    %25 = memref.load %arg2[%c25] : memref<162xf32, #tpu.memory_space<smem>>
    %c26 = arith.constant 26 : index
    %26 = memref.load %arg2[%c26] : memref<162xf32, #tpu.memory_space<smem>>
    %c27 = arith.constant 27 : index
    %27 = memref.load %arg2[%c27] : memref<162xf32, #tpu.memory_space<smem>>
    %c28 = arith.constant 28 : index
    %28 = memref.load %arg2[%c28] : memref<162xf32, #tpu.memory_space<smem>>
    %c29 = arith.constant 29 : index
    %29 = memref.load %arg2[%c29] : memref<162xf32, #tpu.memory_space<smem>>
    %c30 = arith.constant 30 : index
    %30 = memref.load %arg2[%c30] : memref<162xf32, #tpu.memory_space<smem>>
    %c31 = arith.constant 31 : index
    %31 = memref.load %arg2[%c31] : memref<162xf32, #tpu.memory_space<smem>>
    %c32 = arith.constant 32 : index
    %32 = memref.load %arg2[%c32] : memref<162xf32, #tpu.memory_space<smem>>
    %c33 = arith.constant 33 : index
    %33 = memref.load %arg2[%c33] : memref<162xf32, #tpu.memory_space<smem>>
    %c34 = arith.constant 34 : index
    %34 = memref.load %arg2[%c34] : memref<162xf32, #tpu.memory_space<smem>>
    %c35 = arith.constant 35 : index
    %35 = memref.load %arg2[%c35] : memref<162xf32, #tpu.memory_space<smem>>
    %c36 = arith.constant 36 : index
    %36 = memref.load %arg2[%c36] : memref<162xf32, #tpu.memory_space<smem>>
    %c37 = arith.constant 37 : index
    %37 = memref.load %arg2[%c37] : memref<162xf32, #tpu.memory_space<smem>>
    %c38 = arith.constant 38 : index
    %38 = memref.load %arg2[%c38] : memref<162xf32, #tpu.memory_space<smem>>
    %c39 = arith.constant 39 : index
    %39 = memref.load %arg2[%c39] : memref<162xf32, #tpu.memory_space<smem>>
    %c40 = arith.constant 40 : index
    %40 = memref.load %arg2[%c40] : memref<162xf32, #tpu.memory_space<smem>>
    %c41 = arith.constant 41 : index
    %41 = memref.load %arg2[%c41] : memref<162xf32, #tpu.memory_space<smem>>
    %c42 = arith.constant 42 : index
    %42 = memref.load %arg2[%c42] : memref<162xf32, #tpu.memory_space<smem>>
    %c43 = arith.constant 43 : index
    %43 = memref.load %arg2[%c43] : memref<162xf32, #tpu.memory_space<smem>>
    %c44 = arith.constant 44 : index
    %44 = memref.load %arg2[%c44] : memref<162xf32, #tpu.memory_space<smem>>
    %c45 = arith.constant 45 : index
    %45 = memref.load %arg2[%c45] : memref<162xf32, #tpu.memory_space<smem>>
    %c46 = arith.constant 46 : index
    %46 = memref.load %arg2[%c46] : memref<162xf32, #tpu.memory_space<smem>>
    %c47 = arith.constant 47 : index
    %47 = memref.load %arg2[%c47] : memref<162xf32, #tpu.memory_space<smem>>
    %c48 = arith.constant 48 : index
    %48 = memref.load %arg2[%c48] : memref<162xf32, #tpu.memory_space<smem>>
    %c49 = arith.constant 49 : index
    %49 = memref.load %arg2[%c49] : memref<162xf32, #tpu.memory_space<smem>>
    %c50 = arith.constant 50 : index
    %50 = memref.load %arg2[%c50] : memref<162xf32, #tpu.memory_space<smem>>
    %c51 = arith.constant 51 : index
    %51 = memref.load %arg2[%c51] : memref<162xf32, #tpu.memory_space<smem>>
    %c52 = arith.constant 52 : index
    %52 = memref.load %arg2[%c52] : memref<162xf32, #tpu.memory_space<smem>>
    %c53 = arith.constant 53 : index
    %53 = memref.load %arg2[%c53] : memref<162xf32, #tpu.memory_space<smem>>
    %c54 = arith.constant 54 : index
    %54 = memref.load %arg2[%c54] : memref<162xf32, #tpu.memory_space<smem>>
    %c55 = arith.constant 55 : index
    %55 = memref.load %arg2[%c55] : memref<162xf32, #tpu.memory_space<smem>>
    %c56 = arith.constant 56 : index
    %56 = memref.load %arg2[%c56] : memref<162xf32, #tpu.memory_space<smem>>
    %c57 = arith.constant 57 : index
    %57 = memref.load %arg2[%c57] : memref<162xf32, #tpu.memory_space<smem>>
    %c58 = arith.constant 58 : index
    %58 = memref.load %arg2[%c58] : memref<162xf32, #tpu.memory_space<smem>>
    %c59 = arith.constant 59 : index
    %59 = memref.load %arg2[%c59] : memref<162xf32, #tpu.memory_space<smem>>
    %c60 = arith.constant 60 : index
    %60 = memref.load %arg2[%c60] : memref<162xf32, #tpu.memory_space<smem>>
    %c61 = arith.constant 61 : index
    %61 = memref.load %arg2[%c61] : memref<162xf32, #tpu.memory_space<smem>>
    %c62 = arith.constant 62 : index
    %62 = memref.load %arg2[%c62] : memref<162xf32, #tpu.memory_space<smem>>
    %c63 = arith.constant 63 : index
    %63 = memref.load %arg2[%c63] : memref<162xf32, #tpu.memory_space<smem>>
    %c64 = arith.constant 64 : index
    %64 = memref.load %arg2[%c64] : memref<162xf32, #tpu.memory_space<smem>>
    %c65 = arith.constant 65 : index
    %65 = memref.load %arg2[%c65] : memref<162xf32, #tpu.memory_space<smem>>
    %c66 = arith.constant 66 : index
    %66 = memref.load %arg2[%c66] : memref<162xf32, #tpu.memory_space<smem>>
    %c67 = arith.constant 67 : index
    %67 = memref.load %arg2[%c67] : memref<162xf32, #tpu.memory_space<smem>>
    %c68 = arith.constant 68 : index
    %68 = memref.load %arg2[%c68] : memref<162xf32, #tpu.memory_space<smem>>
    %c69 = arith.constant 69 : index
    %69 = memref.load %arg2[%c69] : memref<162xf32, #tpu.memory_space<smem>>
    %c70 = arith.constant 70 : index
    %70 = memref.load %arg2[%c70] : memref<162xf32, #tpu.memory_space<smem>>
    %c71 = arith.constant 71 : index
    %71 = memref.load %arg2[%c71] : memref<162xf32, #tpu.memory_space<smem>>
    %c72 = arith.constant 72 : index
    %72 = memref.load %arg2[%c72] : memref<162xf32, #tpu.memory_space<smem>>
    %c73 = arith.constant 73 : index
    %73 = memref.load %arg2[%c73] : memref<162xf32, #tpu.memory_space<smem>>
    %c74 = arith.constant 74 : index
    %74 = memref.load %arg2[%c74] : memref<162xf32, #tpu.memory_space<smem>>
    %c75 = arith.constant 75 : index
    %75 = memref.load %arg2[%c75] : memref<162xf32, #tpu.memory_space<smem>>
    %c76 = arith.constant 76 : index
    %76 = memref.load %arg2[%c76] : memref<162xf32, #tpu.memory_space<smem>>
    %c77 = arith.constant 77 : index
    %77 = memref.load %arg2[%c77] : memref<162xf32, #tpu.memory_space<smem>>
    %c78 = arith.constant 78 : index
    %78 = memref.load %arg2[%c78] : memref<162xf32, #tpu.memory_space<smem>>
    %c79 = arith.constant 79 : index
    %79 = memref.load %arg2[%c79] : memref<162xf32, #tpu.memory_space<smem>>
    %c80 = arith.constant 80 : index
    %80 = memref.load %arg2[%c80] : memref<162xf32, #tpu.memory_space<smem>>
    %c81 = arith.constant 81 : index
    %81 = memref.load %arg2[%c81] : memref<162xf32, #tpu.memory_space<smem>>
    %c82 = arith.constant 82 : index
    %82 = memref.load %arg2[%c82] : memref<162xf32, #tpu.memory_space<smem>>
    %c83 = arith.constant 83 : index
    %83 = memref.load %arg2[%c83] : memref<162xf32, #tpu.memory_space<smem>>
    %c84 = arith.constant 84 : index
    %84 = memref.load %arg2[%c84] : memref<162xf32, #tpu.memory_space<smem>>
    %c85 = arith.constant 85 : index
    %85 = memref.load %arg2[%c85] : memref<162xf32, #tpu.memory_space<smem>>
    %c86 = arith.constant 86 : index
    %86 = memref.load %arg2[%c86] : memref<162xf32, #tpu.memory_space<smem>>
    %c87 = arith.constant 87 : index
    %87 = memref.load %arg2[%c87] : memref<162xf32, #tpu.memory_space<smem>>
    %c88 = arith.constant 88 : index
    %88 = memref.load %arg2[%c88] : memref<162xf32, #tpu.memory_space<smem>>
    %c89 = arith.constant 89 : index
    %89 = memref.load %arg2[%c89] : memref<162xf32, #tpu.memory_space<smem>>
    %c90 = arith.constant 90 : index
    %90 = memref.load %arg2[%c90] : memref<162xf32, #tpu.memory_space<smem>>
    %c91 = arith.constant 91 : index
    %91 = memref.load %arg2[%c91] : memref<162xf32, #tpu.memory_space<smem>>
    %c92 = arith.constant 92 : index
    %92 = memref.load %arg2[%c92] : memref<162xf32, #tpu.memory_space<smem>>
    %c93 = arith.constant 93 : index
    %93 = memref.load %arg2[%c93] : memref<162xf32, #tpu.memory_space<smem>>
    %c94 = arith.constant 94 : index
    %94 = memref.load %arg2[%c94] : memref<162xf32, #tpu.memory_space<smem>>
    %c95 = arith.constant 95 : index
    %95 = memref.load %arg2[%c95] : memref<162xf32, #tpu.memory_space<smem>>
    %c96 = arith.constant 96 : index
    %96 = memref.load %arg2[%c96] : memref<162xf32, #tpu.memory_space<smem>>
    %c97 = arith.constant 97 : index
    %97 = memref.load %arg2[%c97] : memref<162xf32, #tpu.memory_space<smem>>
    %c98 = arith.constant 98 : index
    %98 = memref.load %arg2[%c98] : memref<162xf32, #tpu.memory_space<smem>>
    %c99 = arith.constant 99 : index
    %99 = memref.load %arg2[%c99] : memref<162xf32, #tpu.memory_space<smem>>
    %c100 = arith.constant 100 : index
    %100 = memref.load %arg2[%c100] : memref<162xf32, #tpu.memory_space<smem>>
    %c101 = arith.constant 101 : index
    %101 = memref.load %arg2[%c101] : memref<162xf32, #tpu.memory_space<smem>>
    %c102 = arith.constant 102 : index
    %102 = memref.load %arg2[%c102] : memref<162xf32, #tpu.memory_space<smem>>
    %c103 = arith.constant 103 : index
    %103 = memref.load %arg2[%c103] : memref<162xf32, #tpu.memory_space<smem>>
    %c104 = arith.constant 104 : index
    %104 = memref.load %arg2[%c104] : memref<162xf32, #tpu.memory_space<smem>>
    %c105 = arith.constant 105 : index
    %105 = memref.load %arg2[%c105] : memref<162xf32, #tpu.memory_space<smem>>
    %c106 = arith.constant 106 : index
    %106 = memref.load %arg2[%c106] : memref<162xf32, #tpu.memory_space<smem>>
    %c107 = arith.constant 107 : index
    %107 = memref.load %arg2[%c107] : memref<162xf32, #tpu.memory_space<smem>>
    %c108 = arith.constant 108 : index
    %108 = memref.load %arg2[%c108] : memref<162xf32, #tpu.memory_space<smem>>
    %c109 = arith.constant 109 : index
    %109 = memref.load %arg2[%c109] : memref<162xf32, #tpu.memory_space<smem>>
    %c110 = arith.constant 110 : index
    %110 = memref.load %arg2[%c110] : memref<162xf32, #tpu.memory_space<smem>>
    %c111 = arith.constant 111 : index
    %111 = memref.load %arg2[%c111] : memref<162xf32, #tpu.memory_space<smem>>
    %c112 = arith.constant 112 : index
    %112 = memref.load %arg2[%c112] : memref<162xf32, #tpu.memory_space<smem>>
    %c113 = arith.constant 113 : index
    %113 = memref.load %arg2[%c113] : memref<162xf32, #tpu.memory_space<smem>>
    %c114 = arith.constant 114 : index
    %114 = memref.load %arg2[%c114] : memref<162xf32, #tpu.memory_space<smem>>
    %c115 = arith.constant 115 : index
    %115 = memref.load %arg2[%c115] : memref<162xf32, #tpu.memory_space<smem>>
    %c116 = arith.constant 116 : index
    %116 = memref.load %arg2[%c116] : memref<162xf32, #tpu.memory_space<smem>>
    %c117 = arith.constant 117 : index
    %117 = memref.load %arg2[%c117] : memref<162xf32, #tpu.memory_space<smem>>
    %c118 = arith.constant 118 : index
    %118 = memref.load %arg2[%c118] : memref<162xf32, #tpu.memory_space<smem>>
    %c119 = arith.constant 119 : index
    %119 = memref.load %arg2[%c119] : memref<162xf32, #tpu.memory_space<smem>>
    %c120 = arith.constant 120 : index
    %120 = memref.load %arg2[%c120] : memref<162xf32, #tpu.memory_space<smem>>
    %c121 = arith.constant 121 : index
    %121 = memref.load %arg2[%c121] : memref<162xf32, #tpu.memory_space<smem>>
    %c122 = arith.constant 122 : index
    %122 = memref.load %arg2[%c122] : memref<162xf32, #tpu.memory_space<smem>>
    %c123 = arith.constant 123 : index
    %123 = memref.load %arg2[%c123] : memref<162xf32, #tpu.memory_space<smem>>
    %c124 = arith.constant 124 : index
    %124 = memref.load %arg2[%c124] : memref<162xf32, #tpu.memory_space<smem>>
    %c125 = arith.constant 125 : index
    %125 = memref.load %arg2[%c125] : memref<162xf32, #tpu.memory_space<smem>>
    %c126 = arith.constant 126 : index
    %126 = memref.load %arg2[%c126] : memref<162xf32, #tpu.memory_space<smem>>
    %c127 = arith.constant 127 : index
    %127 = memref.load %arg2[%c127] : memref<162xf32, #tpu.memory_space<smem>>
    %c128 = arith.constant 128 : index
    %128 = memref.load %arg2[%c128] : memref<162xf32, #tpu.memory_space<smem>>
    %c129 = arith.constant 129 : index
    %129 = memref.load %arg2[%c129] : memref<162xf32, #tpu.memory_space<smem>>
    %c130 = arith.constant 130 : index
    %130 = memref.load %arg2[%c130] : memref<162xf32, #tpu.memory_space<smem>>
    %c131 = arith.constant 131 : index
    %131 = memref.load %arg2[%c131] : memref<162xf32, #tpu.memory_space<smem>>
    %c132 = arith.constant 132 : index
    %132 = memref.load %arg2[%c132] : memref<162xf32, #tpu.memory_space<smem>>
    %c133 = arith.constant 133 : index
    %133 = memref.load %arg2[%c133] : memref<162xf32, #tpu.memory_space<smem>>
    %c134 = arith.constant 134 : index
    %134 = memref.load %arg2[%c134] : memref<162xf32, #tpu.memory_space<smem>>
    %c135 = arith.constant 135 : index
    %135 = memref.load %arg2[%c135] : memref<162xf32, #tpu.memory_space<smem>>
    %c136 = arith.constant 136 : index
    %136 = memref.load %arg2[%c136] : memref<162xf32, #tpu.memory_space<smem>>
    %c137 = arith.constant 137 : index
    %137 = memref.load %arg2[%c137] : memref<162xf32, #tpu.memory_space<smem>>
    %c138 = arith.constant 138 : index
    %138 = memref.load %arg2[%c138] : memref<162xf32, #tpu.memory_space<smem>>
    %c139 = arith.constant 139 : index
    %139 = memref.load %arg2[%c139] : memref<162xf32, #tpu.memory_space<smem>>
    %c140 = arith.constant 140 : index
    %140 = memref.load %arg2[%c140] : memref<162xf32, #tpu.memory_space<smem>>
    %c141 = arith.constant 141 : index
    %141 = memref.load %arg2[%c141] : memref<162xf32, #tpu.memory_space<smem>>
    %c142 = arith.constant 142 : index
    %142 = memref.load %arg2[%c142] : memref<162xf32, #tpu.memory_space<smem>>
    %c143 = arith.constant 143 : index
    %143 = memref.load %arg2[%c143] : memref<162xf32, #tpu.memory_space<smem>>
    %c144 = arith.constant 144 : index
    %144 = memref.load %arg2[%c144] : memref<162xf32, #tpu.memory_space<smem>>
    %c145 = arith.constant 145 : index
    %145 = memref.load %arg2[%c145] : memref<162xf32, #tpu.memory_space<smem>>
    %c146 = arith.constant 146 : index
    %146 = memref.load %arg2[%c146] : memref<162xf32, #tpu.memory_space<smem>>
    %c147 = arith.constant 147 : index
    %147 = memref.load %arg2[%c147] : memref<162xf32, #tpu.memory_space<smem>>
    %c148 = arith.constant 148 : index
    %148 = memref.load %arg2[%c148] : memref<162xf32, #tpu.memory_space<smem>>
    %c149 = arith.constant 149 : index
    %149 = memref.load %arg2[%c149] : memref<162xf32, #tpu.memory_space<smem>>
    %c150 = arith.constant 150 : index
    %150 = memref.load %arg2[%c150] : memref<162xf32, #tpu.memory_space<smem>>
    %c151 = arith.constant 151 : index
    %151 = memref.load %arg2[%c151] : memref<162xf32, #tpu.memory_space<smem>>
    %c152 = arith.constant 152 : index
    %152 = memref.load %arg2[%c152] : memref<162xf32, #tpu.memory_space<smem>>
    %c153 = arith.constant 153 : index
    %153 = memref.load %arg2[%c153] : memref<162xf32, #tpu.memory_space<smem>>
    %c154 = arith.constant 154 : index
    %154 = memref.load %arg2[%c154] : memref<162xf32, #tpu.memory_space<smem>>
    %c155 = arith.constant 155 : index
    %155 = memref.load %arg2[%c155] : memref<162xf32, #tpu.memory_space<smem>>
    %c156 = arith.constant 156 : index
    %156 = memref.load %arg2[%c156] : memref<162xf32, #tpu.memory_space<smem>>
    %c157 = arith.constant 157 : index
    %157 = memref.load %arg2[%c157] : memref<162xf32, #tpu.memory_space<smem>>
    %c158 = arith.constant 158 : index
    %158 = memref.load %arg2[%c158] : memref<162xf32, #tpu.memory_space<smem>>
    %c159 = arith.constant 159 : index
    %159 = memref.load %arg2[%c159] : memref<162xf32, #tpu.memory_space<smem>>
    %c160 = arith.constant 160 : index
    %160 = memref.load %arg2[%c160] : memref<162xf32, #tpu.memory_space<smem>>
    %c161 = arith.constant 161 : index
    %161 = memref.load %arg2[%c161] : memref<162xf32, #tpu.memory_space<smem>>
    %c0_0 = arith.constant 0 : index
    %162 = memref.load %arg3[%c0_0] : memref<6xf32, #tpu.memory_space<smem>>
    %c1_1 = arith.constant 1 : index
    %163 = memref.load %arg3[%c1_1] : memref<6xf32, #tpu.memory_space<smem>>
    %c2_2 = arith.constant 2 : index
    %164 = memref.load %arg3[%c2_2] : memref<6xf32, #tpu.memory_space<smem>>
    %c3_3 = arith.constant 3 : index
    %165 = memref.load %arg3[%c3_3] : memref<6xf32, #tpu.memory_space<smem>>
    %c4_4 = arith.constant 4 : index
    %166 = memref.load %arg3[%c4_4] : memref<6xf32, #tpu.memory_space<smem>>
    %c5_5 = arith.constant 5 : index
    %167 = memref.load %arg3[%c5_5] : memref<6xf32, #tpu.memory_space<smem>>
    %168 = vector.broadcast %162 : f32 to vector<16x16xf32>
    %169 = vector.broadcast %163 : f32 to vector<16x16xf32>
    %170 = vector.broadcast %164 : f32 to vector<16x16xf32>
    %171 = vector.broadcast %165 : f32 to vector<16x16xf32>
    %172 = vector.broadcast %166 : f32 to vector<16x16xf32>
    %173 = vector.broadcast %167 : f32 to vector<16x16xf32>
    %c0_6 = arith.constant 0 : index
    %c0_7 = arith.constant 0 : index
    %c0_8 = arith.constant 0 : index
    %c0_9 = arith.constant 0 : index
    %174 = vector.load %arg1[%c0_6, %c0_7, %c0_8, %c0_9] : memref<1x3x16x16xf32, #tpu.memory_space<vmem>>, vector<1x1x16x16xf32>
    %175 = vector.shape_cast %174 : vector<1x1x16x16xf32> to vector<16x16xf32>
    %176 = vector.broadcast %0 : f32 to vector<16x16xf32>
    %177 = arith.mulf %176, %175 : vector<16x16xf32>
    %178 = arith.addf %168, %177 : vector<16x16xf32>
    %179 = vector.broadcast %27 : f32 to vector<16x16xf32>
    %180 = arith.mulf %179, %175 : vector<16x16xf32>
    %181 = arith.addf %169, %180 : vector<16x16xf32>
    %182 = vector.broadcast %54 : f32 to vector<16x16xf32>
    %183 = arith.mulf %182, %175 : vector<16x16xf32>
    %184 = arith.addf %170, %183 : vector<16x16xf32>
    %185 = vector.broadcast %81 : f32 to vector<16x16xf32>
    %186 = arith.mulf %185, %175 : vector<16x16xf32>
    %187 = arith.addf %171, %186 : vector<16x16xf32>
    %188 = vector.broadcast %108 : f32 to vector<16x16xf32>
    %189 = arith.mulf %188, %175 : vector<16x16xf32>
    %190 = arith.addf %172, %189 : vector<16x16xf32>
    %191 = vector.broadcast %135 : f32 to vector<16x16xf32>
    %192 = arith.mulf %191, %175 : vector<16x16xf32>
    %193 = arith.addf %173, %192 : vector<16x16xf32>
    %c15_i32 = arith.constant 15 : i32
    %194 = tpu.dynamic_rotate %175 by %c15_i32 dim 1 : vector<16x16xf32>, i32 -> vector<16x16xf32>
    %195 = vector.broadcast %1 : f32 to vector<16x16xf32>
    %196 = arith.mulf %195, %194 : vector<16x16xf32>
    %197 = arith.addf %178, %196 : vector<16x16xf32>
    %198 = vector.broadcast %28 : f32 to vector<16x16xf32>
    %199 = arith.mulf %198, %194 : vector<16x16xf32>
    %200 = arith.addf %181, %199 : vector<16x16xf32>
    %201 = vector.broadcast %55 : f32 to vector<16x16xf32>
    %202 = arith.mulf %201, %194 : vector<16x16xf32>
    %203 = arith.addf %184, %202 : vector<16x16xf32>
    %204 = vector.broadcast %82 : f32 to vector<16x16xf32>
    %205 = arith.mulf %204, %194 : vector<16x16xf32>
    %206 = arith.addf %187, %205 : vector<16x16xf32>
    %207 = vector.broadcast %109 : f32 to vector<16x16xf32>
    %208 = arith.mulf %207, %194 : vector<16x16xf32>
    %209 = arith.addf %190, %208 : vector<16x16xf32>
    %210 = vector.broadcast %136 : f32 to vector<16x16xf32>
    %211 = arith.mulf %210, %194 : vector<16x16xf32>
    %212 = arith.addf %193, %211 : vector<16x16xf32>
    %c14_i32 = arith.constant 14 : i32
    %213 = tpu.dynamic_rotate %175 by %c14_i32 dim 1 : vector<16x16xf32>, i32 -> vector<16x16xf32>
    %214 = vector.broadcast %2 : f32 to vector<16x16xf32>
    %215 = arith.mulf %214, %213 : vector<16x16xf32>
    %216 = arith.addf %197, %215 : vector<16x16xf32>
    %217 = vector.broadcast %29 : f32 to vector<16x16xf32>
    %218 = arith.mulf %217, %213 : vector<16x16xf32>
    %219 = arith.addf %200, %218 : vector<16x16xf32>
    %220 = vector.broadcast %56 : f32 to vector<16x16xf32>
    %221 = arith.mulf %220, %213 : vector<16x16xf32>
    %222 = arith.addf %203, %221 : vector<16x16xf32>
    %223 = vector.broadcast %83 : f32 to vector<16x16xf32>
    %224 = arith.mulf %223, %213 : vector<16x16xf32>
    %225 = arith.addf %206, %224 : vector<16x16xf32>
    %226 = vector.broadcast %110 : f32 to vector<16x16xf32>
    %227 = arith.mulf %226, %213 : vector<16x16xf32>
    %228 = arith.addf %209, %227 : vector<16x16xf32>
    %229 = vector.broadcast %137 : f32 to vector<16x16xf32>
    %230 = arith.mulf %229, %213 : vector<16x16xf32>
    %231 = arith.addf %212, %230 : vector<16x16xf32>
    %c15_i32_10 = arith.constant 15 : i32
    %232 = tpu.dynamic_rotate %175 by %c15_i32_10 dim 0 : vector<16x16xf32>, i32 -> vector<16x16xf32>
    %233 = vector.broadcast %3 : f32 to vector<16x16xf32>
    %234 = arith.mulf %233, %232 : vector<16x16xf32>
    %235 = arith.addf %216, %234 : vector<16x16xf32>
    %236 = vector.broadcast %30 : f32 to vector<16x16xf32>
    %237 = arith.mulf %236, %232 : vector<16x16xf32>
    %238 = arith.addf %219, %237 : vector<16x16xf32>
    %239 = vector.broadcast %57 : f32 to vector<16x16xf32>
    %240 = arith.mulf %239, %232 : vector<16x16xf32>
    %241 = arith.addf %222, %240 : vector<16x16xf32>
    %242 = vector.broadcast %84 : f32 to vector<16x16xf32>
    %243 = arith.mulf %242, %232 : vector<16x16xf32>
    %244 = arith.addf %225, %243 : vector<16x16xf32>
    %245 = vector.broadcast %111 : f32 to vector<16x16xf32>
    %246 = arith.mulf %245, %232 : vector<16x16xf32>
    %247 = arith.addf %228, %246 : vector<16x16xf32>
    %248 = vector.broadcast %138 : f32 to vector<16x16xf32>
    %249 = arith.mulf %248, %232 : vector<16x16xf32>
    %250 = arith.addf %231, %249 : vector<16x16xf32>
    %c15_i32_11 = arith.constant 15 : i32
    %251 = tpu.dynamic_rotate %232 by %c15_i32_11 dim 1 : vector<16x16xf32>, i32 -> vector<16x16xf32>
    %252 = vector.broadcast %4 : f32 to vector<16x16xf32>
    %253 = arith.mulf %252, %251 : vector<16x16xf32>
    %254 = arith.addf %235, %253 : vector<16x16xf32>
    %255 = vector.broadcast %31 : f32 to vector<16x16xf32>
    %256 = arith.mulf %255, %251 : vector<16x16xf32>
    %257 = arith.addf %238, %256 : vector<16x16xf32>
    %258 = vector.broadcast %58 : f32 to vector<16x16xf32>
    %259 = arith.mulf %258, %251 : vector<16x16xf32>
    %260 = arith.addf %241, %259 : vector<16x16xf32>
    %261 = vector.broadcast %85 : f32 to vector<16x16xf32>
    %262 = arith.mulf %261, %251 : vector<16x16xf32>
    %263 = arith.addf %244, %262 : vector<16x16xf32>
    %264 = vector.broadcast %112 : f32 to vector<16x16xf32>
    %265 = arith.mulf %264, %251 : vector<16x16xf32>
    %266 = arith.addf %247, %265 : vector<16x16xf32>
    %267 = vector.broadcast %139 : f32 to vector<16x16xf32>
    %268 = arith.mulf %267, %251 : vector<16x16xf32>
    %269 = arith.addf %250, %268 : vector<16x16xf32>
    %c14_i32_12 = arith.constant 14 : i32
    %270 = tpu.dynamic_rotate %232 by %c14_i32_12 dim 1 : vector<16x16xf32>, i32 -> vector<16x16xf32>
    %271 = vector.broadcast %5 : f32 to vector<16x16xf32>
    %272 = arith.mulf %271, %270 : vector<16x16xf32>
    %273 = arith.addf %254, %272 : vector<16x16xf32>
    %274 = vector.broadcast %32 : f32 to vector<16x16xf32>
    %275 = arith.mulf %274, %270 : vector<16x16xf32>
    %276 = arith.addf %257, %275 : vector<16x16xf32>
    %277 = vector.broadcast %59 : f32 to vector<16x16xf32>
    %278 = arith.mulf %277, %270 : vector<16x16xf32>
    %279 = arith.addf %260, %278 : vector<16x16xf32>
    %280 = vector.broadcast %86 : f32 to vector<16x16xf32>
    %281 = arith.mulf %280, %270 : vector<16x16xf32>
    %282 = arith.addf %263, %281 : vector<16x16xf32>
    %283 = vector.broadcast %113 : f32 to vector<16x16xf32>
    %284 = arith.mulf %283, %270 : vector<16x16xf32>
    %285 = arith.addf %266, %284 : vector<16x16xf32>
    %286 = vector.broadcast %140 : f32 to vector<16x16xf32>
    %287 = arith.mulf %286, %270 : vector<16x16xf32>
    %288 = arith.addf %269, %287 : vector<16x16xf32>
    %c14_i32_13 = arith.constant 14 : i32
    %289 = tpu.dynamic_rotate %175 by %c14_i32_13 dim 0 : vector<16x16xf32>, i32 -> vector<16x16xf32>
    %290 = vector.broadcast %6 : f32 to vector<16x16xf32>
    %291 = arith.mulf %290, %289 : vector<16x16xf32>
    %292 = arith.addf %273, %291 : vector<16x16xf32>
    %293 = vector.broadcast %33 : f32 to vector<16x16xf32>
    %294 = arith.mulf %293, %289 : vector<16x16xf32>
    %295 = arith.addf %276, %294 : vector<16x16xf32>
    %296 = vector.broadcast %60 : f32 to vector<16x16xf32>
    %297 = arith.mulf %296, %289 : vector<16x16xf32>
    %298 = arith.addf %279, %297 : vector<16x16xf32>
    %299 = vector.broadcast %87 : f32 to vector<16x16xf32>
    %300 = arith.mulf %299, %289 : vector<16x16xf32>
    %301 = arith.addf %282, %300 : vector<16x16xf32>
    %302 = vector.broadcast %114 : f32 to vector<16x16xf32>
    %303 = arith.mulf %302, %289 : vector<16x16xf32>
    %304 = arith.addf %285, %303 : vector<16x16xf32>
    %305 = vector.broadcast %141 : f32 to vector<16x16xf32>
    %306 = arith.mulf %305, %289 : vector<16x16xf32>
    %307 = arith.addf %288, %306 : vector<16x16xf32>
    %c15_i32_14 = arith.constant 15 : i32
    %308 = tpu.dynamic_rotate %289 by %c15_i32_14 dim 1 : vector<16x16xf32>, i32 -> vector<16x16xf32>
    %309 = vector.broadcast %7 : f32 to vector<16x16xf32>
    %310 = arith.mulf %309, %308 : vector<16x16xf32>
    %311 = arith.addf %292, %310 : vector<16x16xf32>
    %312 = vector.broadcast %34 : f32 to vector<16x16xf32>
    %313 = arith.mulf %312, %308 : vector<16x16xf32>
    %314 = arith.addf %295, %313 : vector<16x16xf32>
    %315 = vector.broadcast %61 : f32 to vector<16x16xf32>
    %316 = arith.mulf %315, %308 : vector<16x16xf32>
    %317 = arith.addf %298, %316 : vector<16x16xf32>
    %318 = vector.broadcast %88 : f32 to vector<16x16xf32>
    %319 = arith.mulf %318, %308 : vector<16x16xf32>
    %320 = arith.addf %301, %319 : vector<16x16xf32>
    %321 = vector.broadcast %115 : f32 to vector<16x16xf32>
    %322 = arith.mulf %321, %308 : vector<16x16xf32>
    %323 = arith.addf %304, %322 : vector<16x16xf32>
    %324 = vector.broadcast %142 : f32 to vector<16x16xf32>
    %325 = arith.mulf %324, %308 : vector<16x16xf32>
    %326 = arith.addf %307, %325 : vector<16x16xf32>
    %c14_i32_15 = arith.constant 14 : i32
    %327 = tpu.dynamic_rotate %289 by %c14_i32_15 dim 1 : vector<16x16xf32>, i32 -> vector<16x16xf32>
    %328 = vector.broadcast %8 : f32 to vector<16x16xf32>
    %329 = arith.mulf %328, %327 : vector<16x16xf32>
    %330 = arith.addf %311, %329 : vector<16x16xf32>
    %331 = vector.broadcast %35 : f32 to vector<16x16xf32>
    %332 = arith.mulf %331, %327 : vector<16x16xf32>
    %333 = arith.addf %314, %332 : vector<16x16xf32>
    %334 = vector.broadcast %62 : f32 to vector<16x16xf32>
    %335 = arith.mulf %334, %327 : vector<16x16xf32>
    %336 = arith.addf %317, %335 : vector<16x16xf32>
    %337 = vector.broadcast %89 : f32 to vector<16x16xf32>
    %338 = arith.mulf %337, %327 : vector<16x16xf32>
    %339 = arith.addf %320, %338 : vector<16x16xf32>
    %340 = vector.broadcast %116 : f32 to vector<16x16xf32>
    %341 = arith.mulf %340, %327 : vector<16x16xf32>
    %342 = arith.addf %323, %341 : vector<16x16xf32>
    %343 = vector.broadcast %143 : f32 to vector<16x16xf32>
    %344 = arith.mulf %343, %327 : vector<16x16xf32>
    %345 = arith.addf %326, %344 : vector<16x16xf32>
    %c0_16 = arith.constant 0 : index
    %c1_17 = arith.constant 1 : index
    %c0_18 = arith.constant 0 : index
    %c0_19 = arith.constant 0 : index
    %346 = vector.load %arg1[%c0_16, %c1_17, %c0_18, %c0_19] : memref<1x3x16x16xf32, #tpu.memory_space<vmem>>, vector<1x1x16x16xf32>
    %347 = vector.shape_cast %346 : vector<1x1x16x16xf32> to vector<16x16xf32>
    %348 = vector.broadcast %9 : f32 to vector<16x16xf32>
    %349 = arith.mulf %348, %347 : vector<16x16xf32>
    %350 = arith.addf %330, %349 : vector<16x16xf32>
    %351 = vector.broadcast %36 : f32 to vector<16x16xf32>
    %352 = arith.mulf %351, %347 : vector<16x16xf32>
    %353 = arith.addf %333, %352 : vector<16x16xf32>
    %354 = vector.broadcast %63 : f32 to vector<16x16xf32>
    %355 = arith.mulf %354, %347 : vector<16x16xf32>
    %356 = arith.addf %336, %355 : vector<16x16xf32>
    %357 = vector.broadcast %90 : f32 to vector<16x16xf32>
    %358 = arith.mulf %357, %347 : vector<16x16xf32>
    %359 = arith.addf %339, %358 : vector<16x16xf32>
    %360 = vector.broadcast %117 : f32 to vector<16x16xf32>
    %361 = arith.mulf %360, %347 : vector<16x16xf32>
    %362 = arith.addf %342, %361 : vector<16x16xf32>
    %363 = vector.broadcast %144 : f32 to vector<16x16xf32>
    %364 = arith.mulf %363, %347 : vector<16x16xf32>
    %365 = arith.addf %345, %364 : vector<16x16xf32>
    %c15_i32_20 = arith.constant 15 : i32
    %366 = tpu.dynamic_rotate %347 by %c15_i32_20 dim 1 : vector<16x16xf32>, i32 -> vector<16x16xf32>
    %367 = vector.broadcast %10 : f32 to vector<16x16xf32>
    %368 = arith.mulf %367, %366 : vector<16x16xf32>
    %369 = arith.addf %350, %368 : vector<16x16xf32>
    %370 = vector.broadcast %37 : f32 to vector<16x16xf32>
    %371 = arith.mulf %370, %366 : vector<16x16xf32>
    %372 = arith.addf %353, %371 : vector<16x16xf32>
    %373 = vector.broadcast %64 : f32 to vector<16x16xf32>
    %374 = arith.mulf %373, %366 : vector<16x16xf32>
    %375 = arith.addf %356, %374 : vector<16x16xf32>
    %376 = vector.broadcast %91 : f32 to vector<16x16xf32>
    %377 = arith.mulf %376, %366 : vector<16x16xf32>
    %378 = arith.addf %359, %377 : vector<16x16xf32>
    %379 = vector.broadcast %118 : f32 to vector<16x16xf32>
    %380 = arith.mulf %379, %366 : vector<16x16xf32>
    %381 = arith.addf %362, %380 : vector<16x16xf32>
    %382 = vector.broadcast %145 : f32 to vector<16x16xf32>
    %383 = arith.mulf %382, %366 : vector<16x16xf32>
    %384 = arith.addf %365, %383 : vector<16x16xf32>
    %c14_i32_21 = arith.constant 14 : i32
    %385 = tpu.dynamic_rotate %347 by %c14_i32_21 dim 1 : vector<16x16xf32>, i32 -> vector<16x16xf32>
    %386 = vector.broadcast %11 : f32 to vector<16x16xf32>
    %387 = arith.mulf %386, %385 : vector<16x16xf32>
    %388 = arith.addf %369, %387 : vector<16x16xf32>
    %389 = vector.broadcast %38 : f32 to vector<16x16xf32>
    %390 = arith.mulf %389, %385 : vector<16x16xf32>
    %391 = arith.addf %372, %390 : vector<16x16xf32>
    %392 = vector.broadcast %65 : f32 to vector<16x16xf32>
    %393 = arith.mulf %392, %385 : vector<16x16xf32>
    %394 = arith.addf %375, %393 : vector<16x16xf32>
    %395 = vector.broadcast %92 : f32 to vector<16x16xf32>
    %396 = arith.mulf %395, %385 : vector<16x16xf32>
    %397 = arith.addf %378, %396 : vector<16x16xf32>
    %398 = vector.broadcast %119 : f32 to vector<16x16xf32>
    %399 = arith.mulf %398, %385 : vector<16x16xf32>
    %400 = arith.addf %381, %399 : vector<16x16xf32>
    %401 = vector.broadcast %146 : f32 to vector<16x16xf32>
    %402 = arith.mulf %401, %385 : vector<16x16xf32>
    %403 = arith.addf %384, %402 : vector<16x16xf32>
    %c15_i32_22 = arith.constant 15 : i32
    %404 = tpu.dynamic_rotate %347 by %c15_i32_22 dim 0 : vector<16x16xf32>, i32 -> vector<16x16xf32>
    %405 = vector.broadcast %12 : f32 to vector<16x16xf32>
    %406 = arith.mulf %405, %404 : vector<16x16xf32>
    %407 = arith.addf %388, %406 : vector<16x16xf32>
    %408 = vector.broadcast %39 : f32 to vector<16x16xf32>
    %409 = arith.mulf %408, %404 : vector<16x16xf32>
    %410 = arith.addf %391, %409 : vector<16x16xf32>
    %411 = vector.broadcast %66 : f32 to vector<16x16xf32>
    %412 = arith.mulf %411, %404 : vector<16x16xf32>
    %413 = arith.addf %394, %412 : vector<16x16xf32>
    %414 = vector.broadcast %93 : f32 to vector<16x16xf32>
    %415 = arith.mulf %414, %404 : vector<16x16xf32>
    %416 = arith.addf %397, %415 : vector<16x16xf32>
    %417 = vector.broadcast %120 : f32 to vector<16x16xf32>
    %418 = arith.mulf %417, %404 : vector<16x16xf32>
    %419 = arith.addf %400, %418 : vector<16x16xf32>
    %420 = vector.broadcast %147 : f32 to vector<16x16xf32>
    %421 = arith.mulf %420, %404 : vector<16x16xf32>
    %422 = arith.addf %403, %421 : vector<16x16xf32>
    %c15_i32_23 = arith.constant 15 : i32
    %423 = tpu.dynamic_rotate %404 by %c15_i32_23 dim 1 : vector<16x16xf32>, i32 -> vector<16x16xf32>
    %424 = vector.broadcast %13 : f32 to vector<16x16xf32>
    %425 = arith.mulf %424, %423 : vector<16x16xf32>
    %426 = arith.addf %407, %425 : vector<16x16xf32>
    %427 = vector.broadcast %40 : f32 to vector<16x16xf32>
    %428 = arith.mulf %427, %423 : vector<16x16xf32>
    %429 = arith.addf %410, %428 : vector<16x16xf32>
    %430 = vector.broadcast %67 : f32 to vector<16x16xf32>
    %431 = arith.mulf %430, %423 : vector<16x16xf32>
    %432 = arith.addf %413, %431 : vector<16x16xf32>
    %433 = vector.broadcast %94 : f32 to vector<16x16xf32>
    %434 = arith.mulf %433, %423 : vector<16x16xf32>
    %435 = arith.addf %416, %434 : vector<16x16xf32>
    %436 = vector.broadcast %121 : f32 to vector<16x16xf32>
    %437 = arith.mulf %436, %423 : vector<16x16xf32>
    %438 = arith.addf %419, %437 : vector<16x16xf32>
    %439 = vector.broadcast %148 : f32 to vector<16x16xf32>
    %440 = arith.mulf %439, %423 : vector<16x16xf32>
    %441 = arith.addf %422, %440 : vector<16x16xf32>
    %c14_i32_24 = arith.constant 14 : i32
    %442 = tpu.dynamic_rotate %404 by %c14_i32_24 dim 1 : vector<16x16xf32>, i32 -> vector<16x16xf32>
    %443 = vector.broadcast %14 : f32 to vector<16x16xf32>
    %444 = arith.mulf %443, %442 : vector<16x16xf32>
    %445 = arith.addf %426, %444 : vector<16x16xf32>
    %446 = vector.broadcast %41 : f32 to vector<16x16xf32>
    %447 = arith.mulf %446, %442 : vector<16x16xf32>
    %448 = arith.addf %429, %447 : vector<16x16xf32>
    %449 = vector.broadcast %68 : f32 to vector<16x16xf32>
    %450 = arith.mulf %449, %442 : vector<16x16xf32>
    %451 = arith.addf %432, %450 : vector<16x16xf32>
    %452 = vector.broadcast %95 : f32 to vector<16x16xf32>
    %453 = arith.mulf %452, %442 : vector<16x16xf32>
    %454 = arith.addf %435, %453 : vector<16x16xf32>
    %455 = vector.broadcast %122 : f32 to vector<16x16xf32>
    %456 = arith.mulf %455, %442 : vector<16x16xf32>
    %457 = arith.addf %438, %456 : vector<16x16xf32>
    %458 = vector.broadcast %149 : f32 to vector<16x16xf32>
    %459 = arith.mulf %458, %442 : vector<16x16xf32>
    %460 = arith.addf %441, %459 : vector<16x16xf32>
    %c14_i32_25 = arith.constant 14 : i32
    %461 = tpu.dynamic_rotate %347 by %c14_i32_25 dim 0 : vector<16x16xf32>, i32 -> vector<16x16xf32>
    %462 = vector.broadcast %15 : f32 to vector<16x16xf32>
    %463 = arith.mulf %462, %461 : vector<16x16xf32>
    %464 = arith.addf %445, %463 : vector<16x16xf32>
    %465 = vector.broadcast %42 : f32 to vector<16x16xf32>
    %466 = arith.mulf %465, %461 : vector<16x16xf32>
    %467 = arith.addf %448, %466 : vector<16x16xf32>
    %468 = vector.broadcast %69 : f32 to vector<16x16xf32>
    %469 = arith.mulf %468, %461 : vector<16x16xf32>
    %470 = arith.addf %451, %469 : vector<16x16xf32>
    %471 = vector.broadcast %96 : f32 to vector<16x16xf32>
    %472 = arith.mulf %471, %461 : vector<16x16xf32>
    %473 = arith.addf %454, %472 : vector<16x16xf32>
    %474 = vector.broadcast %123 : f32 to vector<16x16xf32>
    %475 = arith.mulf %474, %461 : vector<16x16xf32>
    %476 = arith.addf %457, %475 : vector<16x16xf32>
    %477 = vector.broadcast %150 : f32 to vector<16x16xf32>
    %478 = arith.mulf %477, %461 : vector<16x16xf32>
    %479 = arith.addf %460, %478 : vector<16x16xf32>
    %c15_i32_26 = arith.constant 15 : i32
    %480 = tpu.dynamic_rotate %461 by %c15_i32_26 dim 1 : vector<16x16xf32>, i32 -> vector<16x16xf32>
    %481 = vector.broadcast %16 : f32 to vector<16x16xf32>
    %482 = arith.mulf %481, %480 : vector<16x16xf32>
    %483 = arith.addf %464, %482 : vector<16x16xf32>
    %484 = vector.broadcast %43 : f32 to vector<16x16xf32>
    %485 = arith.mulf %484, %480 : vector<16x16xf32>
    %486 = arith.addf %467, %485 : vector<16x16xf32>
    %487 = vector.broadcast %70 : f32 to vector<16x16xf32>
    %488 = arith.mulf %487, %480 : vector<16x16xf32>
    %489 = arith.addf %470, %488 : vector<16x16xf32>
    %490 = vector.broadcast %97 : f32 to vector<16x16xf32>
    %491 = arith.mulf %490, %480 : vector<16x16xf32>
    %492 = arith.addf %473, %491 : vector<16x16xf32>
    %493 = vector.broadcast %124 : f32 to vector<16x16xf32>
    %494 = arith.mulf %493, %480 : vector<16x16xf32>
    %495 = arith.addf %476, %494 : vector<16x16xf32>
    %496 = vector.broadcast %151 : f32 to vector<16x16xf32>
    %497 = arith.mulf %496, %480 : vector<16x16xf32>
    %498 = arith.addf %479, %497 : vector<16x16xf32>
    %c14_i32_27 = arith.constant 14 : i32
    %499 = tpu.dynamic_rotate %461 by %c14_i32_27 dim 1 : vector<16x16xf32>, i32 -> vector<16x16xf32>
    %500 = vector.broadcast %17 : f32 to vector<16x16xf32>
    %501 = arith.mulf %500, %499 : vector<16x16xf32>
    %502 = arith.addf %483, %501 : vector<16x16xf32>
    %503 = vector.broadcast %44 : f32 to vector<16x16xf32>
    %504 = arith.mulf %503, %499 : vector<16x16xf32>
    %505 = arith.addf %486, %504 : vector<16x16xf32>
    %506 = vector.broadcast %71 : f32 to vector<16x16xf32>
    %507 = arith.mulf %506, %499 : vector<16x16xf32>
    %508 = arith.addf %489, %507 : vector<16x16xf32>
    %509 = vector.broadcast %98 : f32 to vector<16x16xf32>
    %510 = arith.mulf %509, %499 : vector<16x16xf32>
    %511 = arith.addf %492, %510 : vector<16x16xf32>
    %512 = vector.broadcast %125 : f32 to vector<16x16xf32>
    %513 = arith.mulf %512, %499 : vector<16x16xf32>
    %514 = arith.addf %495, %513 : vector<16x16xf32>
    %515 = vector.broadcast %152 : f32 to vector<16x16xf32>
    %516 = arith.mulf %515, %499 : vector<16x16xf32>
    %517 = arith.addf %498, %516 : vector<16x16xf32>
    %c0_28 = arith.constant 0 : index
    %c2_29 = arith.constant 2 : index
    %c0_30 = arith.constant 0 : index
    %c0_31 = arith.constant 0 : index
    %518 = vector.load %arg1[%c0_28, %c2_29, %c0_30, %c0_31] : memref<1x3x16x16xf32, #tpu.memory_space<vmem>>, vector<1x1x16x16xf32>
    %519 = vector.shape_cast %518 : vector<1x1x16x16xf32> to vector<16x16xf32>
    %520 = vector.broadcast %18 : f32 to vector<16x16xf32>
    %521 = arith.mulf %520, %519 : vector<16x16xf32>
    %522 = arith.addf %502, %521 : vector<16x16xf32>
    %523 = vector.broadcast %45 : f32 to vector<16x16xf32>
    %524 = arith.mulf %523, %519 : vector<16x16xf32>
    %525 = arith.addf %505, %524 : vector<16x16xf32>
    %526 = vector.broadcast %72 : f32 to vector<16x16xf32>
    %527 = arith.mulf %526, %519 : vector<16x16xf32>
    %528 = arith.addf %508, %527 : vector<16x16xf32>
    %529 = vector.broadcast %99 : f32 to vector<16x16xf32>
    %530 = arith.mulf %529, %519 : vector<16x16xf32>
    %531 = arith.addf %511, %530 : vector<16x16xf32>
    %532 = vector.broadcast %126 : f32 to vector<16x16xf32>
    %533 = arith.mulf %532, %519 : vector<16x16xf32>
    %534 = arith.addf %514, %533 : vector<16x16xf32>
    %535 = vector.broadcast %153 : f32 to vector<16x16xf32>
    %536 = arith.mulf %535, %519 : vector<16x16xf32>
    %537 = arith.addf %517, %536 : vector<16x16xf32>
    %c15_i32_32 = arith.constant 15 : i32
    %538 = tpu.dynamic_rotate %519 by %c15_i32_32 dim 1 : vector<16x16xf32>, i32 -> vector<16x16xf32>
    %539 = vector.broadcast %19 : f32 to vector<16x16xf32>
    %540 = arith.mulf %539, %538 : vector<16x16xf32>
    %541 = arith.addf %522, %540 : vector<16x16xf32>
    %542 = vector.broadcast %46 : f32 to vector<16x16xf32>
    %543 = arith.mulf %542, %538 : vector<16x16xf32>
    %544 = arith.addf %525, %543 : vector<16x16xf32>
    %545 = vector.broadcast %73 : f32 to vector<16x16xf32>
    %546 = arith.mulf %545, %538 : vector<16x16xf32>
    %547 = arith.addf %528, %546 : vector<16x16xf32>
    %548 = vector.broadcast %100 : f32 to vector<16x16xf32>
    %549 = arith.mulf %548, %538 : vector<16x16xf32>
    %550 = arith.addf %531, %549 : vector<16x16xf32>
    %551 = vector.broadcast %127 : f32 to vector<16x16xf32>
    %552 = arith.mulf %551, %538 : vector<16x16xf32>
    %553 = arith.addf %534, %552 : vector<16x16xf32>
    %554 = vector.broadcast %154 : f32 to vector<16x16xf32>
    %555 = arith.mulf %554, %538 : vector<16x16xf32>
    %556 = arith.addf %537, %555 : vector<16x16xf32>
    %c14_i32_33 = arith.constant 14 : i32
    %557 = tpu.dynamic_rotate %519 by %c14_i32_33 dim 1 : vector<16x16xf32>, i32 -> vector<16x16xf32>
    %558 = vector.broadcast %20 : f32 to vector<16x16xf32>
    %559 = arith.mulf %558, %557 : vector<16x16xf32>
    %560 = arith.addf %541, %559 : vector<16x16xf32>
    %561 = vector.broadcast %47 : f32 to vector<16x16xf32>
    %562 = arith.mulf %561, %557 : vector<16x16xf32>
    %563 = arith.addf %544, %562 : vector<16x16xf32>
    %564 = vector.broadcast %74 : f32 to vector<16x16xf32>
    %565 = arith.mulf %564, %557 : vector<16x16xf32>
    %566 = arith.addf %547, %565 : vector<16x16xf32>
    %567 = vector.broadcast %101 : f32 to vector<16x16xf32>
    %568 = arith.mulf %567, %557 : vector<16x16xf32>
    %569 = arith.addf %550, %568 : vector<16x16xf32>
    %570 = vector.broadcast %128 : f32 to vector<16x16xf32>
    %571 = arith.mulf %570, %557 : vector<16x16xf32>
    %572 = arith.addf %553, %571 : vector<16x16xf32>
    %573 = vector.broadcast %155 : f32 to vector<16x16xf32>
    %574 = arith.mulf %573, %557 : vector<16x16xf32>
    %575 = arith.addf %556, %574 : vector<16x16xf32>
    %c15_i32_34 = arith.constant 15 : i32
    %576 = tpu.dynamic_rotate %519 by %c15_i32_34 dim 0 : vector<16x16xf32>, i32 -> vector<16x16xf32>
    %577 = vector.broadcast %21 : f32 to vector<16x16xf32>
    %578 = arith.mulf %577, %576 : vector<16x16xf32>
    %579 = arith.addf %560, %578 : vector<16x16xf32>
    %580 = vector.broadcast %48 : f32 to vector<16x16xf32>
    %581 = arith.mulf %580, %576 : vector<16x16xf32>
    %582 = arith.addf %563, %581 : vector<16x16xf32>
    %583 = vector.broadcast %75 : f32 to vector<16x16xf32>
    %584 = arith.mulf %583, %576 : vector<16x16xf32>
    %585 = arith.addf %566, %584 : vector<16x16xf32>
    %586 = vector.broadcast %102 : f32 to vector<16x16xf32>
    %587 = arith.mulf %586, %576 : vector<16x16xf32>
    %588 = arith.addf %569, %587 : vector<16x16xf32>
    %589 = vector.broadcast %129 : f32 to vector<16x16xf32>
    %590 = arith.mulf %589, %576 : vector<16x16xf32>
    %591 = arith.addf %572, %590 : vector<16x16xf32>
    %592 = vector.broadcast %156 : f32 to vector<16x16xf32>
    %593 = arith.mulf %592, %576 : vector<16x16xf32>
    %594 = arith.addf %575, %593 : vector<16x16xf32>
    %c15_i32_35 = arith.constant 15 : i32
    %595 = tpu.dynamic_rotate %576 by %c15_i32_35 dim 1 : vector<16x16xf32>, i32 -> vector<16x16xf32>
    %596 = vector.broadcast %22 : f32 to vector<16x16xf32>
    %597 = arith.mulf %596, %595 : vector<16x16xf32>
    %598 = arith.addf %579, %597 : vector<16x16xf32>
    %599 = vector.broadcast %49 : f32 to vector<16x16xf32>
    %600 = arith.mulf %599, %595 : vector<16x16xf32>
    %601 = arith.addf %582, %600 : vector<16x16xf32>
    %602 = vector.broadcast %76 : f32 to vector<16x16xf32>
    %603 = arith.mulf %602, %595 : vector<16x16xf32>
    %604 = arith.addf %585, %603 : vector<16x16xf32>
    %605 = vector.broadcast %103 : f32 to vector<16x16xf32>
    %606 = arith.mulf %605, %595 : vector<16x16xf32>
    %607 = arith.addf %588, %606 : vector<16x16xf32>
    %608 = vector.broadcast %130 : f32 to vector<16x16xf32>
    %609 = arith.mulf %608, %595 : vector<16x16xf32>
    %610 = arith.addf %591, %609 : vector<16x16xf32>
    %611 = vector.broadcast %157 : f32 to vector<16x16xf32>
    %612 = arith.mulf %611, %595 : vector<16x16xf32>
    %613 = arith.addf %594, %612 : vector<16x16xf32>
    %c14_i32_36 = arith.constant 14 : i32
    %614 = tpu.dynamic_rotate %576 by %c14_i32_36 dim 1 : vector<16x16xf32>, i32 -> vector<16x16xf32>
    %615 = vector.broadcast %23 : f32 to vector<16x16xf32>
    %616 = arith.mulf %615, %614 : vector<16x16xf32>
    %617 = arith.addf %598, %616 : vector<16x16xf32>
    %618 = vector.broadcast %50 : f32 to vector<16x16xf32>
    %619 = arith.mulf %618, %614 : vector<16x16xf32>
    %620 = arith.addf %601, %619 : vector<16x16xf32>
    %621 = vector.broadcast %77 : f32 to vector<16x16xf32>
    %622 = arith.mulf %621, %614 : vector<16x16xf32>
    %623 = arith.addf %604, %622 : vector<16x16xf32>
    %624 = vector.broadcast %104 : f32 to vector<16x16xf32>
    %625 = arith.mulf %624, %614 : vector<16x16xf32>
    %626 = arith.addf %607, %625 : vector<16x16xf32>
    %627 = vector.broadcast %131 : f32 to vector<16x16xf32>
    %628 = arith.mulf %627, %614 : vector<16x16xf32>
    %629 = arith.addf %610, %628 : vector<16x16xf32>
    %630 = vector.broadcast %158 : f32 to vector<16x16xf32>
    %631 = arith.mulf %630, %614 : vector<16x16xf32>
    %632 = arith.addf %613, %631 : vector<16x16xf32>
    %c14_i32_37 = arith.constant 14 : i32
    %633 = tpu.dynamic_rotate %519 by %c14_i32_37 dim 0 : vector<16x16xf32>, i32 -> vector<16x16xf32>
    %634 = vector.broadcast %24 : f32 to vector<16x16xf32>
    %635 = arith.mulf %634, %633 : vector<16x16xf32>
    %636 = arith.addf %617, %635 : vector<16x16xf32>
    %637 = vector.broadcast %51 : f32 to vector<16x16xf32>
    %638 = arith.mulf %637, %633 : vector<16x16xf32>
    %639 = arith.addf %620, %638 : vector<16x16xf32>
    %640 = vector.broadcast %78 : f32 to vector<16x16xf32>
    %641 = arith.mulf %640, %633 : vector<16x16xf32>
    %642 = arith.addf %623, %641 : vector<16x16xf32>
    %643 = vector.broadcast %105 : f32 to vector<16x16xf32>
    %644 = arith.mulf %643, %633 : vector<16x16xf32>
    %645 = arith.addf %626, %644 : vector<16x16xf32>
    %646 = vector.broadcast %132 : f32 to vector<16x16xf32>
    %647 = arith.mulf %646, %633 : vector<16x16xf32>
    %648 = arith.addf %629, %647 : vector<16x16xf32>
    %649 = vector.broadcast %159 : f32 to vector<16x16xf32>
    %650 = arith.mulf %649, %633 : vector<16x16xf32>
    %651 = arith.addf %632, %650 : vector<16x16xf32>
    %c15_i32_38 = arith.constant 15 : i32
    %652 = tpu.dynamic_rotate %633 by %c15_i32_38 dim 1 : vector<16x16xf32>, i32 -> vector<16x16xf32>
    %653 = vector.broadcast %25 : f32 to vector<16x16xf32>
    %654 = arith.mulf %653, %652 : vector<16x16xf32>
    %655 = arith.addf %636, %654 : vector<16x16xf32>
    %656 = vector.broadcast %52 : f32 to vector<16x16xf32>
    %657 = arith.mulf %656, %652 : vector<16x16xf32>
    %658 = arith.addf %639, %657 : vector<16x16xf32>
    %659 = vector.broadcast %79 : f32 to vector<16x16xf32>
    %660 = arith.mulf %659, %652 : vector<16x16xf32>
    %661 = arith.addf %642, %660 : vector<16x16xf32>
    %662 = vector.broadcast %106 : f32 to vector<16x16xf32>
    %663 = arith.mulf %662, %652 : vector<16x16xf32>
    %664 = arith.addf %645, %663 : vector<16x16xf32>
    %665 = vector.broadcast %133 : f32 to vector<16x16xf32>
    %666 = arith.mulf %665, %652 : vector<16x16xf32>
    %667 = arith.addf %648, %666 : vector<16x16xf32>
    %668 = vector.broadcast %160 : f32 to vector<16x16xf32>
    %669 = arith.mulf %668, %652 : vector<16x16xf32>
    %670 = arith.addf %651, %669 : vector<16x16xf32>
    %c14_i32_39 = arith.constant 14 : i32
    %671 = tpu.dynamic_rotate %633 by %c14_i32_39 dim 1 : vector<16x16xf32>, i32 -> vector<16x16xf32>
    %672 = vector.broadcast %26 : f32 to vector<16x16xf32>
    %673 = arith.mulf %672, %671 : vector<16x16xf32>
    %674 = arith.addf %655, %673 : vector<16x16xf32>
    %675 = vector.broadcast %53 : f32 to vector<16x16xf32>
    %676 = arith.mulf %675, %671 : vector<16x16xf32>
    %677 = arith.addf %658, %676 : vector<16x16xf32>
    %678 = vector.broadcast %80 : f32 to vector<16x16xf32>
    %679 = arith.mulf %678, %671 : vector<16x16xf32>
    %680 = arith.addf %661, %679 : vector<16x16xf32>
    %681 = vector.broadcast %107 : f32 to vector<16x16xf32>
    %682 = arith.mulf %681, %671 : vector<16x16xf32>
    %683 = arith.addf %664, %682 : vector<16x16xf32>
    %684 = vector.broadcast %134 : f32 to vector<16x16xf32>
    %685 = arith.mulf %684, %671 : vector<16x16xf32>
    %686 = arith.addf %667, %685 : vector<16x16xf32>
    %687 = vector.broadcast %161 : f32 to vector<16x16xf32>
    %688 = arith.mulf %687, %671 : vector<16x16xf32>
    %689 = arith.addf %670, %688 : vector<16x16xf32>
    %c0_40 = arith.constant 0 : index
    %c0_41 = arith.constant 0 : index
    %c0_42 = arith.constant 0 : index
    %c0_43 = arith.constant 0 : index
    %690 = vector.load %arg4[%c0_40, %c0_41, %c0_42, %c0_43] : memref<1x6x16x16xf32, #tpu.memory_space<vmem>>, vector<1x1x16x16xf32>
    %691 = vector.shape_cast %690 : vector<1x1x16x16xf32> to vector<16x16xf32>
    %692 = vector.shape_cast %674 : vector<16x16xf32> to vector<1x1x16x16xf32>
    tpu.vector_store %arg4[%c0_40, %c0_41, %c0_42, %c0_43], %692 {strides = array<i32>} : memref<1x6x16x16xf32, #tpu.memory_space<vmem>>, vector<1x1x16x16xf32>,
    %c0_44 = arith.constant 0 : index
    %c1_45 = arith.constant 1 : index
    %c0_46 = arith.constant 0 : index
    %c0_47 = arith.constant 0 : index
    %693 = vector.load %arg4[%c0_44, %c1_45, %c0_46, %c0_47] : memref<1x6x16x16xf32, #tpu.memory_space<vmem>>, vector<1x1x16x16xf32>
    %694 = vector.shape_cast %693 : vector<1x1x16x16xf32> to vector<16x16xf32>
    %695 = vector.shape_cast %677 : vector<16x16xf32> to vector<1x1x16x16xf32>
    tpu.vector_store %arg4[%c0_44, %c1_45, %c0_46, %c0_47], %695 {strides = array<i32>} : memref<1x6x16x16xf32, #tpu.memory_space<vmem>>, vector<1x1x16x16xf32>,
    %c0_48 = arith.constant 0 : index
    %c2_49 = arith.constant 2 : index
    %c0_50 = arith.constant 0 : index
    %c0_51 = arith.constant 0 : index
    %696 = vector.load %arg4[%c0_48, %c2_49, %c0_50, %c0_51] : memref<1x6x16x16xf32, #tpu.memory_space<vmem>>, vector<1x1x16x16xf32>
    %697 = vector.shape_cast %696 : vector<1x1x16x16xf32> to vector<16x16xf32>
    %698 = vector.shape_cast %680 : vector<16x16xf32> to vector<1x1x16x16xf32>
    tpu.vector_store %arg4[%c0_48, %c2_49, %c0_50, %c0_51], %698 {strides = array<i32>} : memref<1x6x16x16xf32, #tpu.memory_space<vmem>>, vector<1x1x16x16xf32>,
    %c0_52 = arith.constant 0 : index
    %c3_53 = arith.constant 3 : index
    %c0_54 = arith.constant 0 : index
    %c0_55 = arith.constant 0 : index
    %699 = vector.load %arg4[%c0_52, %c3_53, %c0_54, %c0_55] : memref<1x6x16x16xf32, #tpu.memory_space<vmem>>, vector<1x1x16x16xf32>
    %700 = vector.shape_cast %699 : vector<1x1x16x16xf32> to vector<16x16xf32>
    %701 = vector.shape_cast %683 : vector<16x16xf32> to vector<1x1x16x16xf32>
    tpu.vector_store %arg4[%c0_52, %c3_53, %c0_54, %c0_55], %701 {strides = array<i32>} : memref<1x6x16x16xf32, #tpu.memory_space<vmem>>, vector<1x1x16x16xf32>,
    %c0_56 = arith.constant 0 : index
    %c4_57 = arith.constant 4 : index
    %c0_58 = arith.constant 0 : index
    %c0_59 = arith.constant 0 : index
    %702 = vector.load %arg4[%c0_56, %c4_57, %c0_58, %c0_59] : memref<1x6x16x16xf32, #tpu.memory_space<vmem>>, vector<1x1x16x16xf32>
    %703 = vector.shape_cast %702 : vector<1x1x16x16xf32> to vector<16x16xf32>
    %704 = vector.shape_cast %686 : vector<16x16xf32> to vector<1x1x16x16xf32>
    tpu.vector_store %arg4[%c0_56, %c4_57, %c0_58, %c0_59], %704 {strides = array<i32>} : memref<1x6x16x16xf32, #tpu.memory_space<vmem>>, vector<1x1x16x16xf32>,
    %c0_60 = arith.constant 0 : index
    %c5_61 = arith.constant 5 : index
    %c0_62 = arith.constant 0 : index
    %c0_63 = arith.constant 0 : index
    %705 = vector.load %arg4[%c0_60, %c5_61, %c0_62, %c0_63] : memref<1x6x16x16xf32, #tpu.memory_space<vmem>>, vector<1x1x16x16xf32>
    %706 = vector.shape_cast %705 : vector<1x1x16x16xf32> to vector<16x16xf32>
    %707 = vector.shape_cast %689 : vector<16x16xf32> to vector<1x1x16x16xf32>
    tpu.vector_store %arg4[%c0_60, %c5_61, %c0_62, %c0_63], %707 {strides = array<i32>} : memref<1x6x16x16xf32, #tpu.memory_space<vmem>>, vector<1x1x16x16xf32>,
    return
  }
  func.func @transform_0(%arg0: i32) -> (i32, i32, i32, i32) {
    %c0_i32 = arith.constant 0 : i32
    %c0_i32_0 = arith.constant 0 : i32
    %c0_i32_1 = arith.constant 0 : i32
    %c0_i32_2 = arith.constant 0 : i32
    return %arg0, %c0_i32, %c0_i32_0, %c0_i32_1 : i32, i32, i32, i32
  }
  func.func @transform_1(%arg0: i32) -> i32 {
    %c0_i32 = arith.constant 0 : i32
    %c0_i32_0 = arith.constant 0 : i32
    return %c0_i32 : i32
  }
  func.func @transform_2(%arg0: i32) -> i32 {
    %c0_i32 = arith.constant 0 : i32
    %c0_i32_0 = arith.constant 0 : i32
    return %c0_i32 : i32
  }
  func.func @transform_3(%arg0: i32) -> (i32, i32, i32, i32) {
    %c0_i32 = arith.constant 0 : i32
    %c0_i32_0 = arith.constant 0 : i32
    %c0_i32_1 = arith.constant 0 : i32
    %c0_i32_2 = arith.constant 0 : i32
    return %arg0, %c0_i32, %c0_i32_0, %c0_i32_1 : i32, i32, i32, i32
  }
}

</mosaic_0001>

<llo_original>
// kernel: tpu_custom_call.1
$region0: #{tpu_custom_call.1}
  #allocation0 [shape = 'u32[]', space=smem, size = 0x4, offset = 0x4, fixed_abs, tag = 'smem constant byte address 0x4 - core index']
  #allocation1 [shape = 'u32[144,128]{1,0:T(1,128)}', space=vmem, size = 0x12000, scoped, tag = 'internal scratch']
  %s0 = inlined_call_operand.hbm [shape: f32[2,3,16,16], index: 0, kind: input, shape index: {}]
  %s1 = inlined_call_operand.vmem [shape: f32[162], index: 1, kind: input, shape index: {}]
  %s2 = inlined_call_operand.vmem [shape: f32[6], index: 2, kind: input, shape index: {}]
  %s3 = inlined_call_operand.hbm [shape: f32[2,6,16,16], index: 3, kind: output, shape index: {}]
  %s4 = sld [smem:[#allocation0]]
  $region57: #{tpu_custom_call.1} parent=0
    _
  %s6 = ssub.s32 1, %s4
  %s7 = scalar_select 0, %s6, %s4
  $region1: #{tpu_custom_call.1} parent=0
    #allocation2 [shape = 'u8[49152]{0}', space=vmem, size = 0xc000, scoped, tag = 'input window, operand 0']
    #allocation3 [shape = 's32[2]{0}', space=sflag, size = 0x8, scoped, tag = 'scoped memory for tpu_custom_call.1']
    #allocation4 [shape = 's32[2]{0}', space=sflag, size = 0x8, scoped, tag = 'scoped memory for tpu_custom_call.1']
    #allocation5 [shape = 's32[2]{0}', space=sflag, size = 0x8, scoped, tag = 'scoped memory for tpu_custom_call.1']
    #allocation6 [shape = 'u8[1024]{0}', space=smem, size = 0x400, scoped, tag = 'input window, operand 1, single buffered']
    #allocation7 [shape = 'u8[512]{0}', space=smem, size = 0x200, scoped, tag = 'input window, operand 2, single buffered']
    #allocation8 [shape = 's32[1]{0}', space=sflag, size = 0x4, scoped, tag = 'scoped memory for tpu_custom_call.1']
    #allocation9 [shape = 'u8[98304]{0}', space=vmem, size = 0x18000, scoped, tag = 'output window, operand 0']
    %8 = vsyncpa [#allocation3], 0
    %s9 = scalar_lea.sflag [#allocation3], 1
    %10 = vsyncpa %s9, 0
    %11 = vsyncpa [#allocation5], 0
    %12 = vsyncpa [#allocation8], 0
    %13 = vsyncpa [#allocation4], 0
    %s14 = scalar_lea.sflag [#allocation4], 1
    %15 = vsyncpa %s14, 0
    loop: start=0, step=1, limit=4
    $region2: #{tpu_custom_call.1} parent=1 // loop_pre_header
      _
    $region3: #{tpu_custom_call.1} parent=1 // loop_header
      %s17 = sphi 0, %s21
      %p18 = scmp.ge.s32.totalorder %s17, 4
      %s27 = sphi 0, %s29
      %s30 = sphi 0, %s27
      %s31 = sphi 0, %s30
      %s47 = sphi 0, %s31
      %s51 = sphi 0, %s51
      %s53 = sphi 0, %s51
      %s54 = sphi 0, %s53
      %s68 = sphi 0, %s54
      %s72 = sphi 0, %s72
      %s74 = sphi 0, %s72
      %s75 = sphi 0, %s74
      %s89 = sphi 0, %s75
      %s95 = sphi 0, %s97
      %s98 = sphi 0, %s95
      %s99 = sphi 0, %s98
      %s115 = sphi 0, %s99
    $region4: #{tpu_custom_call.1} parent=1 // loop_header_branch
      %20 = sbr.rel (%p18) target = $region8
    $region5: #{tpu_custom_call.1} parent=1 // loop_body
      %s22 = ssub.s32 %s17, 1
      %s23 = ssub.s32 %s17, 2
      %s24 = sadd.s32 %s17, 1
      %s25 = ssub.s32 %s17, %s24
      %p26 = scmp.eq.s32.totalorder %s25, 0
      %s28 = sadd.s32 %s27, 1
      %s29 = scalar_select %p26, %s27, %s28
      %p32 = pneg %p26
      %p33 = scmp.eq.s32.totalorder %s17, 1
      %p34 = por %p32, %p33
      %p35 = scmp.ne.s32.totalorder %s27, %s30
      %p36 = scmp.eq.s32.totalorder %s17, 0
      %p37 = por %p35, %p36
      %p38 = scmp.ne.s32.totalorder %s27, %s30
      %p39 = scmp.eq.s32.totalorder %s22, 1
      %p40 = por %p38, %p39
      %p41 = scmp.ne.s32.totalorder %s30, %s31
      %p42 = scmp.eq.s32.totalorder %s22, 0
      %p43 = por %p41, %p42
      %p44 = scmp.ne.s32.totalorder %s30, %s31
      %p45 = scmp.eq.s32.totalorder %s23, 1
      %p46 = por %p44, %p45
      %p48 = scmp.ne.s32.totalorder %s31, %s47
      %p49 = scmp.eq.s32.totalorder %s23, 0
      %p50 = por %p48, %p49
      %s52 = sadd.s32 %s51, 1
      %p55 = scmp.eq.s32.totalorder %s17, 1
      %p56 = scmp.ne.s32.totalorder %s51, %s53
      %p57 = scmp.eq.s32.totalorder %s17, 0
      %p58 = por %p56, %p57
      %p59 = scmp.ne.s32.totalorder %s51, %s53
      %p60 = scmp.eq.s32.totalorder %s22, 1
      %p61 = por %p59, %p60
      %p62 = scmp.ne.s32.totalorder %s53, %s54
      %p63 = scmp.eq.s32.totalorder %s22, 0
      %p64 = por %p62, %p63
      %p65 = scmp.ne.s32.totalorder %s53, %s54
      %p66 = scmp.eq.s32.totalorder %s23, 1
      %p67 = por %p65, %p66
      %p69 = scmp.ne.s32.totalorder %s54, %s68
      %p70 = scmp.eq.s32.totalorder %s23, 0
      %p71 = por %p69, %p70
      %s73 = sadd.s32 %s72, 1
      %p76 = scmp.eq.s32.totalorder %s17, 1
      %p77 = scmp.ne.s32.totalorder %s72, %s74
      %p78 = scmp.eq.s32.totalorder %s17, 0
      %p79 = por %p77, %p78
      %p80 = scmp.ne.s32.totalorder %s72, %s74
      %p81 = scmp.eq.s32.totalorder %s22, 1
      %p82 = por %p80, %p81
      %p83 = scmp.ne.s32.totalorder %s74, %s75
      %p84 = scmp.eq.s32.totalorder %s22, 0
      %p85 = por %p83, %p84
      %p86 = scmp.ne.s32.totalorder %s74, %s75
      %p87 = scmp.eq.s32.totalorder %s23, 1
      %p88 = por %p86, %p87
      %p90 = scmp.ne.s32.totalorder %s75, %s89
      %p91 = scmp.eq.s32.totalorder %s23, 0
      %p92 = por %p90, %p91
      %s93 = ssub.s32 %s17, %s24
      %p94 = scmp.eq.s32.totalorder %s93, 0
      %s96 = sadd.s32 %s95, 1
      %s97 = scalar_select %p94, %s95, %s96
      %p100 = pneg %p94
      %p101 = scmp.eq.s32.totalorder %s17, 1
      %p102 = por %p100, %p101
      %p103 = scmp.ne.s32.totalorder %s95, %s98
      %p104 = scmp.eq.s32.totalorder %s17, 0
      %p105 = por %p103, %p104
      %p106 = scmp.ne.s32.totalorder %s95, %s98
      %p107 = scmp.eq.s32.totalorder %s22, 1
      %p108 = por %p106, %p107
      %p109 = scmp.ne.s32.totalorder %s98, %s99
      %p110 = scmp.eq.s32.totalorder %s22, 0
      %p111 = por %p109, %p110
      %p112 = scmp.ne.s32.totalorder %s98, %s99
      %p113 = scmp.eq.s32.totalorder %s23, 1
      %p114 = por %p112, %p113
      %p116 = scmp.ne.s32.totalorder %s99, %s115
      %p117 = scmp.eq.s32.totalorder %s23, 0
      %p118 = por %p116, %p117
      %p119 = scmp.le.s32.totalorder 1, %s17
      %p120 = scmp.lt.s32.totalorder %s17, 3
      %p121 = pnand %p119, %p120
      %p122 = pneg %p121
      // Predicated region
      $region9: #{tpu_custom_call.1} parent=5 // pred_check
        _
      $region10: #{tpu_custom_call.1} parent=5 // pred_check_branch
        %124 = sbr.rel (%p121) target = $region12
      $region11: #{tpu_custom_call.1} parent=5 // pred_region
        %s125 = ssub.s32 %s17, 1
        // Predicated region
        $region13: #{tpu_custom_call.1} parent=11 // pred_check
          %p126 = pneg %p64
        $region14: #{tpu_custom_call.1} parent=11 // pred_check_branch
          %128 = sbr.rel (%p126) target = $region16
        $region15: #{tpu_custom_call.1} parent=11 // pred_region
          %s130 = ssub.s32 32, 32
          %131 = vsyncadd [#allocation5], %s130
          %s133 = sshll.u32 %s1, 4
          %s134 = int_to_ptr.vmem [resolvable:$true] %s133
          %136 = dma.vmem_to_smem %s134, 32, [#allocation6], [#allocation5]
        $region16: #{tpu_custom_call.1} parent=11 // pred_fallthru
          _
        // Predicated region
        $region17: #{tpu_custom_call.1} parent=11 // pred_check
          %p137 = pneg %p85
        $region18: #{tpu_custom_call.1} parent=11 // pred_check_branch
          %139 = sbr.rel (%p137) target = $region20
        $region19: #{tpu_custom_call.1} parent=11 // pred_region
          %s141 = ssub.s32 16, 16
          %142 = vsyncadd [#allocation8], %s141
          %s144 = sshll.u32 %s2, 4
          %s145 = int_to_ptr.vmem [resolvable:$true] %s144
          %147 = dma.vmem_to_smem %s145, 16, [#allocation7], [#allocation8]
        $region20: #{tpu_custom_call.1} parent=11 // pred_fallthru
          _
      $region12: #{tpu_custom_call.1} parent=5 // pred_fallthru
        _
      %p148 = scmp.lt.s32.totalorder %s17, 2
      // Predicated region
      $region21: #{tpu_custom_call.1} parent=5 // pred_check
        %p149 = pneg %p148
      $region22: #{tpu_custom_call.1} parent=5 // pred_check_branch
        %151 = sbr.rel (%p149) target = $region24
      $region23: #{tpu_custom_call.1} parent=5 // pred_region
        // Predicated region
        $region25: #{tpu_custom_call.1} parent=23 // pred_check
          %p152 = pneg %p37
        $region26: #{tpu_custom_call.1} parent=23 // pred_check_branch
          %154 = sbr.rel (%p152) target = $region28
        $region27: #{tpu_custom_call.1} parent=23 // pred_region
          %s155 = sand.u32 %s27, 1
          %s156 = scalar_lea.sflag [#allocation3], %s155
          %s157 = sand.u32 %s27, 1
          %s158 = smul.addr %s157, 48
          %s159 = scalar_lea.vmem [#allocation2], %s158
          %s161 = ssub.s32 768, 768
          %162 = vsyncadd %s156, %s161
          %s163 = smul.addr %s17, 6
          %s164 = smul.addr %s163, 128
          %s165 = scalar_lea.hbm %s0, %s164
          %s166 = sshll.u32 %s159, 4
          %s167 = int_to_ptr.vmem [resolvable:$true] %s166
          %172 = dma.hbm_to_vmem [thread:$0]  %s165, 768, %s167, %s156, 128, 128, 8
        $region28: #{tpu_custom_call.1} parent=23 // pred_fallthru
          _
      $region24: #{tpu_custom_call.1} parent=5 // pred_fallthru
        _
      %p173 = scmp.le.s32.totalorder 1, %s17
      %p174 = scmp.lt.s32.totalorder %s17, 3
      %p175 = pnand %p173, %p174
      %p176 = pneg %p175
      // Predicated region
      $region29: #{tpu_custom_call.1} parent=5 // pred_check
        _
      $region30: #{tpu_custom_call.1} parent=5 // pred_check_branch
        %178 = sbr.rel (%p175) target = $region32
      $region31: #{tpu_custom_call.1} parent=5 // pred_region
        %s179 = ssub.s32 %s17, 1
        %s180 = sand.u32 %s30, 1
        %s181 = scalar_lea.sflag [#allocation3], %s180
        %s182 = sand.u32 %s30, 1
        %s183 = smul.addr %s182, 48
        %s184 = scalar_lea.vmem [#allocation2], %s183
        // Predicated region
        $region33: #{tpu_custom_call.1} parent=31 // pred_check
          %p185 = pneg %p43
        $region34: #{tpu_custom_call.1} parent=31 // pred_check_branch
          %187 = sbr.rel (%p185) target = $region36
        $region35: #{tpu_custom_call.1} parent=31 // pred_region
          %188 = dma.done %s181, 768
        $region36: #{tpu_custom_call.1} parent=31 // pred_fallthru
          _
        // Predicated region
        $region37: #{tpu_custom_call.1} parent=31 // pred_check
          %p189 = pneg %p64
        $region38: #{tpu_custom_call.1} parent=31 // pred_check_branch
          %191 = sbr.rel (%p189) target = $region40
        $region39: #{tpu_custom_call.1} parent=31 // pred_region
          %192 = dma.done [#allocation5], 32
        $region40: #{tpu_custom_call.1} parent=31 // pred_fallthru
          _
        // Predicated region
        $region41: #{tpu_custom_call.1} parent=31 // pred_check
          %p193 = pneg %p85
        $region42: #{tpu_custom_call.1} parent=31 // pred_check_branch
          %195 = sbr.rel (%p193) target = $region44
        $region43: #{tpu_custom_call.1} parent=31 // pred_region
          %196 = dma.done [#allocation8], 16
        $region44: #{tpu_custom_call.1} parent=31 // pred_fallthru
          _
        %197 = sfence
        %s198 = sand.u32 %s30, 1
        %s199 = scalar_lea.sflag [#allocation3], %s198
        %s200 = sand.u32 %s30, 1
        %s201 = smul.addr %s200, 48
        %s202 = scalar_lea.vmem [#allocation2], %s201
        %p203 = pneg %p43
        %p204 = pneg %p40
        %p205 = pneg %p64
        %p206 = pneg %p61
        %p207 = pneg %p85
        %p208 = pneg %p82
        %p209 = pneg %p111
        %p210 = pneg %p108
        %s211 = sand.u32 %s98, 1
        %s212 = scalar_lea.sflag [#allocation4], %s211
        %s213 = sand.u32 %s98, 1
        %s214 = smul.addr %s213, 96
        %s215 = scalar_lea.vmem [#allocation9], %s214
        %s216 = sld [smem:[#allocation6]]
        %s217 = sld [smem:[#allocation6 + $0x1]]
        %s218 = sld [smem:[#allocation6 + $0x2]]
        %s219 = sld [smem:[#allocation6 + $0x3]]
        %s220 = sld [smem:[#allocation6 + $0x4]]
        %s221 = sld [smem:[#allocation6 + $0x5]]
        %s222 = sld [smem:[#allocation6 + $0x6]]
        %s223 = sld [smem:[#allocation6 + $0x7]]
        %s224 = sld [smem:[#allocation6 + $0x8]]
        %s225 = sld [smem:[#allocation6 + $0x9]]
        %s226 = sld [smem:[#allocation6 + $0xa]]
        %s227 = sld [smem:[#allocation6 + $0xb]]
        %s228 = sld [smem:[#allocation6 + $0xc]]
        %s229 = sld [smem:[#allocation6 + $0xd]]
        %s230 = sld [smem:[#allocation6 + $0xe]]
        %s231 = sld [smem:[#allocation6 + $0xf]]
        %s232 = sld [smem:[#allocation6 + $0x10]]
        %s233 = sld [smem:[#allocation6 + $0x11]]
        %s234 = sld [smem:[#allocation6 + $0x12]]
        %s235 = sld [smem:[#allocation6 + $0x13]]
        %s236 = sld [smem:[#allocation6 + $0x14]]
        %s237 = sld [smem:[#allocation6 + $0x15]]
        %s238 = sld [smem:[#allocation6 + $0x16]]
        %s239 = sld [smem:[#allocation6 + $0x17]]
        %s240 = sld [smem:[#allocation6 + $0x18]]
        %s241 = sld [smem:[#allocation6 + $0x19]]
        %s242 = sld [smem:[#allocation6 + $0x1a]]
        %s243 = sld [smem:[#allocation6 + $0x1b]]
        %s244 = sld [smem:[#allocation6 + $0x1c]]
        %s245 = sld [smem:[#allocation6 + $0x1d]]
        %s246 = sld [smem:[#allocation6 + $0x1e]]
        %s247 = sld [smem:[#allocation6 + $0x1f]]
        %s248 = sld [smem:[#allocation6 + $0x20]]
        %s249 = sld [smem:[#allocation6 + $0x21]]
        %s250 = sld [smem:[#allocation6 + $0x22]]
        %s251 = sld [smem:[#allocation6 + $0x23]]
        %s252 = sld [smem:[#allocation6 + $0x24]]
        %s253 = sld [smem:[#allocation6 + $0x25]]
        %s254 = sld [smem:[#allocation6 + $0x26]]
        %s255 = sld [smem:[#allocation6 + $0x27]]
        %s256 = sld [smem:[#allocation6 + $0x28]]
        %s257 = sld [smem:[#allocation6 + $0x29]]
        %s258 = sld [smem:[#allocation6 + $0x2a]]
        %s259 = sld [smem:[#allocation6 + $0x2b]]
        %s260 = sld [smem:[#allocation6 + $0x2c]]
        %s261 = sld [smem:[#allocation6 + $0x2d]]
        %s262 = sld [smem:[#allocation6 + $0x2e]]
        %s263 = sld [smem:[#allocation6 + $0x2f]]
        %s264 = sld [smem:[#allocation6 + $0x30]]
        %s265 = sld [smem:[#allocation6 + $0x31]]
        %s266 = sld [smem:[#allocation6 + $0x32]]
        %s267 = sld [smem:[#allocation6 + $0x33]]
        %s268 = sld [smem:[#allocation6 + $0x34]]
        %s269 = sld [smem:[#allocation6 + $0x35]]
        %s270 = sld [smem:[#allocation6 + $0x36]]
        %s271 = sld [smem:[#allocation6 + $0x37]]
        %s272 = sld [smem:[#allocation6 + $0x38]]
        %s273 = sld [smem:[#allocation6 + $0x39]]
        %s274 = sld [smem:[#allocation6 + $0x3a]]
        %s275 = sld [smem:[#allocation6 + $0x3b]]
        %s276 = sld [smem:[#allocation6 + $0x3c]]
        %s277 = sld [smem:[#allocation6 + $0x3d]]
        %s278 = sld [smem:[#allocation6 + $0x3e]]
        %s279 = sld [smem:[#allocation6 + $0x3f]]
        %s280 = sld [smem:[#allocation6 + $0x40]]
        %s281 = sld [smem:[#allocation6 + $0x41]]
        %s282 = sld [smem:[#allocation6 + $0x42]]
        %s283 = sld [smem:[#allocation6 + $0x43]]
        %s284 = sld [smem:[#allocation6 + $0x44]]
        %s285 = sld [smem:[#allocation6 + $0x45]]
        %s286 = sld [smem:[#allocation6 + $0x46]]
        %s287 = sld [smem:[#allocation6 + $0x47]]
        %s288 = sld [smem:[#allocation6 + $0x48]]
        %s289 = sld [smem:[#allocation6 + $0x49]]
        %s290 = sld [smem:[#allocation6 + $0x4a]]
        %s291 = sld [smem:[#allocation6 + $0x4b]]
        %s292 = sld [smem:[#allocation6 + $0x4c]]
        %s293 = sld [smem:[#allocation6 + $0x4d]]
        %s294 = sld [smem:[#allocation6 + $0x4e]]
        %s295 = sld [smem:[#allocation6 + $0x4f]]
        %s296 = sld [smem:[#allocation6 + $0x50]]
        %s297 = sld [smem:[#allocation6 + $0x51]]
        %s298 = sld [smem:[#allocation6 + $0x52]]
        %s299 = sld [smem:[#allocation6 + $0x53]]
        %s300 = sld [smem:[#allocation6 + $0x54]]
        %s301 = sld [smem:[#allocation6 + $0x55]]
        %s302 = sld [smem:[#allocation6 + $0x56]]
        %s303 = sld [smem:[#allocation6 + $0x57]]
        %s304 = sld [smem:[#allocation6 + $0x58]]
        %s305 = sld [smem:[#allocation6 + $0x59]]
        %s306 = sld [smem:[#allocation6 + $0x5a]]
        %s307 = sld [smem:[#allocation6 + $0x5b]]
        %s308 = sld [smem:[#allocation6 + $0x5c]]
        %s309 = sld [smem:[#allocation6 + $0x5d]]
        %s310 = sld [smem:[#allocation6 + $0x5e]]
        %s311 = sld [smem:[#allocation6 + $0x5f]]
        %s312 = sld [smem:[#allocation6 + $0x60]]
        %s313 = sld [smem:[#allocation6 + $0x61]]
        %s314 = sld [smem:[#allocation6 + $0x62]]
        %s315 = sld [smem:[#allocation6 + $0x63]]
        %s316 = sld [smem:[#allocation6 + $0x64]]
        %s317 = sld [smem:[#allocation6 + $0x65]]
        %s318 = sld [smem:[#allocation6 + $0x66]]
        %s319 = sld [smem:[#allocation6 + $0x67]]
        %s320 = sld [smem:[#allocation6 + $0x68]]
        %s321 = sld [smem:[#allocation6 + $0x69]]
        %s322 = sld [smem:[#allocation6 + $0x6a]]
        %s323 = sld [smem:[#allocation6 + $0x6b]]
        %s324 = sld [smem:[#allocation6 + $0x6c]]
        %s325 = sld [smem:[#allocation6 + $0x6d]]
        %s326 = sld [smem:[#allocation6 + $0x6e]]
        %s327 = sld [smem:[#allocation6 + $0x6f]]
        %s328 = sld [smem:[#allocation6 + $0x70]]
        %s329 = sld [smem:[#allocation6 + $0x71]]
        %s330 = sld [smem:[#allocation6 + $0x72]]
        %s331 = sld [smem:[#allocation6 + $0x73]]
        %s332 = sld [smem:[#allocation6 + $0x74]]
        %s333 = sld [smem:[#allocation6 + $0x75]]
        %s334 = sld [smem:[#allocation6 + $0x76]]
        %s335 = sld [smem:[#allocation6 + $0x77]]
        %s336 = sld [smem:[#allocation6 + $0x78]]
        %s337 = sld [smem:[#allocation6 + $0x79]]
        %s338 = sld [smem:[#allocation6 + $0x7a]]
        %s339 = sld [smem:[#allocation6 + $0x7b]]
        %s340 = sld [smem:[#allocation6 + $0x7c]]
        %s341 = sld [smem:[#allocation6 + $0x7d]]
        %s342 = sld [smem:[#allocation6 + $0x7e]]
        %s343 = sld [smem:[#allocation6 + $0x7f]]
        %s344 = sld [smem:[#allocation6 + $0x80]]
        %s345 = sld [smem:[#allocation6 + $0x81]]
        %s346 = sld [smem:[#allocation6 + $0x82]]
        %s347 = sld [smem:[#allocation6 + $0x83]]
        %s348 = sld [smem:[#allocation6 + $0x84]]
        %s349 = sld [smem:[#allocation6 + $0x85]]
        %s350 = sld [smem:[#allocation6 + $0x86]]
        %s351 = sld [smem:[#allocation6 + $0x87]]
        %s352 = sld [smem:[#allocation6 + $0x88]]
        %s353 = sld [smem:[#allocation6 + $0x89]]
        %s354 = sld [smem:[#allocation6 + $0x8a]]
        %s355 = sld [smem:[#allocation6 + $0x8b]]
        %s356 = sld [smem:[#allocation6 + $0x8c]]
        %s357 = sld [smem:[#allocation6 + $0x8d]]
        %s358 = sld [smem:[#allocation6 + $0x8e]]
        %s359 = sld [smem:[#allocation6 + $0x8f]]
        %s360 = sld [smem:[#allocation6 + $0x90]]
        %s361 = sld [smem:[#allocation6 + $0x91]]
        %s362 = sld [smem:[#allocation6 + $0x92]]
        %s363 = sld [smem:[#allocation6 + $0x93]]
        %s364 = sld [smem:[#allocation6 + $0x94]]
        %s365 = sld [smem:[#allocation6 + $0x95]]
        %s366 = sld [smem:[#allocation6 + $0x96]]
        %s367 = sld [smem:[#allocation6 + $0x97]]
        %s368 = sld [smem:[#allocation6 + $0x98]]
        %s369 = sld [smem:[#allocation6 + $0x99]]
        %s370 = sld [smem:[#allocation6 + $0x9a]]
        %s371 = sld [smem:[#allocation6 + $0x9b]]
        %s372 = sld [smem:[#allocation6 + $0x9c]]
        %s373 = sld [smem:[#allocation6 + $0x9d]]
        %s374 = sld [smem:[#allocation6 + $0x9e]]
        %s375 = sld [smem:[#allocation6 + $0x9f]]
        %s376 = sld [smem:[#allocation6 + $0xa0]]
        %s377 = sld [smem:[#allocation6 + $0xa1]]
        %s378 = sld [smem:[#allocation7]]
        %s379 = sld [smem:[#allocation7 + $0x1]]
        %s380 = sld [smem:[#allocation7 + $0x2]]
        %s381 = sld [smem:[#allocation7 + $0x3]]
        %s382 = sld [smem:[#allocation7 + $0x4]]
        %s383 = sld [smem:[#allocation7 + $0x5]]
        %v384 = vstv %s378
        %v385 = vstv %s379
        %v386 = vstv %s380
        %v387 = vstv %s381
        %v388 = vstv %s382
        %v389 = vstv %s383
        %v390 = vld [vmem:[%s184] sm:$0xff]
        %v391 = vld [vmem:[%s184 + $0x8] sm:$0xff]
        %v392 = vstv %s216
        %v393 = vmul.f32 %v392, %v390
        %v394 = vmul.f32 %v392, %v391
        %v395 = vadd.f32 %v384, %v393
        %v396 = vadd.f32 %v384, %v394
        %v397 = vstv %s243
        %v398 = vmul.f32 %v397, %v390
        %v399 = vmul.f32 %v397, %v391
        %v400 = vadd.f32 %v385, %v398
        %v401 = vadd.f32 %v385, %v399
        %v402 = vstv %s270
        %v403 = vmul.f32 %v402, %v390
        %v404 = vmul.f32 %v402, %v391
        %v405 = vadd.f32 %v386, %v403
        %v406 = vadd.f32 %v386, %v404
        %v407 = vstv %s297
        %v408 = vmul.f32 %v407, %v390
        %v409 = vmul.f32 %v407, %v391
        %v410 = vadd.f32 %v387, %v408
        %v411 = vadd.f32 %v387, %v409
        %v412 = vstv %s324
        %v413 = vmul.f32 %v412, %v390
        %v414 = vmul.f32 %v412, %v391
        %v415 = vadd.f32 %v388, %v413
        %v416 = vadd.f32 %v388, %v414
        %v417 = vstv %s351
        %v418 = vmul.f32 %v417, %v390
        %v419 = vmul.f32 %v417, %v391
        %v420 = vadd.f32 %v389, %v418
        %v421 = vadd.f32 %v389, %v419
        %vm422 = vcmask 1047680
        %423 = vrot.lane.b32.xlu0 %v390, 16
        %v424 = vpop.permute.xlu0 %423
        %v425 = vsel %vm422, %v424, %v390
        %426 = vrot.lane.b32.xlu0 %v391, 16
        %v427 = vpop.permute.xlu0 %426
        %v428 = vsel %vm422, %v427, %v391
        %429 = vrot.lane.b32.xlu0 %v425, 16
        %v430 = vpop.permute.xlu0 %429
        %431 = vrot.lane.b32.xlu0 %v428, 16
        %v432 = vpop.permute.xlu0 %431
        %v433 = vsel %vm422, %v430, %v390
        %v434 = vsel %vm422, %v432, %v391
        %v435 = vstv %s217
        %v436 = vmul.f32 %v435, %v433
        %v437 = vmul.f32 %v435, %v434
        %440 = vrot.lane.b32.xlu0 %v436, 127
        %v441 = vpop.permute.xlu0 %440
        %442 = vrot.lane.b32.xlu0 %v437, 127
        %v443 = vpop.permute.xlu0 %442
        %v446 = vadd.f32 %v395, %v441
        %v447 = vadd.f32 %v396, %v443
        %v448 = vstv %s244
        %v449 = vmul.f32 %v448, %v433
        %v450 = vmul.f32 %v448, %v434
        %453 = vrot.lane.b32.xlu0 %v449, 127
        %v454 = vpop.permute.xlu0 %453
        %455 = vrot.lane.b32.xlu0 %v450, 127
        %v456 = vpop.permute.xlu0 %455
        %v459 = vadd.f32 %v400, %v454
        %v460 = vadd.f32 %v401, %v456
        %v461 = vstv %s271
        %v462 = vmul.f32 %v461, %v433
        %v463 = vmul.f32 %v461, %v434
        %466 = vrot.lane.b32.xlu0 %v462, 127
        %v467 = vpop.permute.xlu0 %466
        %468 = vrot.lane.b32.xlu0 %v463, 127
        %v469 = vpop.permute.xlu0 %468
        %v472 = vadd.f32 %v405, %v467
        %v473 = vadd.f32 %v406, %v469
        %v474 = vstv %s298
        %v475 = vmul.f32 %v474, %v433
        %v476 = vmul.f32 %v474, %v434
        %479 = vrot.lane.b32.xlu0 %v475, 127
        %v480 = vpop.permute.xlu0 %479
        %481 = vrot.lane.b32.xlu0 %v476, 127
        %v482 = vpop.permute.xlu0 %481
        %v485 = vadd.f32 %v410, %v480
        %v486 = vadd.f32 %v411, %v482
        %v487 = vstv %s325
        %v488 = vmul.f32 %v487, %v433
        %v489 = vmul.f32 %v487, %v434
        %492 = vrot.lane.b32.xlu0 %v488, 127
        %v493 = vpop.permute.xlu0 %492
        %494 = vrot.lane.b32.xlu0 %v489, 127
        %v495 = vpop.permute.xlu0 %494
        %v498 = vadd.f32 %v415, %v493
        %v499 = vadd.f32 %v416, %v495
        %v500 = vstv %s352
        %v501 = vmul.f32 %v500, %v433
        %v502 = vmul.f32 %v500, %v434
        %505 = vrot.lane.b32.xlu0 %v501, 127
        %v506 = vpop.permute.xlu0 %505
        %507 = vrot.lane.b32.xlu0 %v502, 127
        %v508 = vpop.permute.xlu0 %507
        %v511 = vadd.f32 %v420, %v506
        %v512 = vadd.f32 %v421, %v508
        %v513 = vstv %s218
        %v514 = vmul.f32 %v513, %v433
        %v515 = vmul.f32 %v513, %v434
        %518 = vrot.lane.b32.xlu0 %v514, 126
        %v519 = vpop.permute.xlu0 %518
        %520 = vrot.lane.b32.xlu0 %v515, 126
        %v521 = vpop.permute.xlu0 %520
        %v524 = vadd.f32 %v446, %v519
        %v525 = vadd.f32 %v447, %v521
        %v526 = vstv %s245
        %v527 = vmul.f32 %v526, %v433
        %v528 = vmul.f32 %v526, %v434
        %531 = vrot.lane.b32.xlu0 %v527, 126
        %v532 = vpop.permute.xlu0 %531
        %533 = vrot.lane.b32.xlu0 %v528, 126
        %v534 = vpop.permute.xlu0 %533
        %v537 = vadd.f32 %v459, %v532
        %v538 = vadd.f32 %v460, %v534
        %v539 = vstv %s272
        %v540 = vmul.f32 %v539, %v433
        %v541 = vmul.f32 %v539, %v434
        %544 = vrot.lane.b32.xlu0 %v540, 126
        %v545 = vpop.permute.xlu0 %544
        %546 = vrot.lane.b32.xlu0 %v541, 126
        %v547 = vpop.permute.xlu0 %546
        %v550 = vadd.f32 %v472, %v545
        %v551 = vadd.f32 %v473, %v547
        %v552 = vstv %s299
        %v553 = vmul.f32 %v552, %v433
        %v554 = vmul.f32 %v552, %v434
        %557 = vrot.lane.b32.xlu0 %v553, 126
        %v558 = vpop.permute.xlu0 %557
        %559 = vrot.lane.b32.xlu0 %v554, 126
        %v560 = vpop.permute.xlu0 %559
        %v563 = vadd.f32 %v485, %v558
        %v564 = vadd.f32 %v486, %v560
        %v565 = vstv %s326
        %v566 = vmul.f32 %v565, %v433
        %v567 = vmul.f32 %v565, %v434
        %570 = vrot.lane.b32.xlu0 %v566, 126
        %v571 = vpop.permute.xlu0 %570
        %572 = vrot.lane.b32.xlu0 %v567, 126
        %v573 = vpop.permute.xlu0 %572
        %v576 = vadd.f32 %v498, %v571
        %v577 = vadd.f32 %v499, %v573
        %v578 = vstv %s353
        %v579 = vmul.f32 %v578, %v433
        %v580 = vmul.f32 %v578, %v434
        %583 = vrot.lane.b32.xlu0 %v579, 126
        %v584 = vpop.permute.xlu0 %583
        %585 = vrot.lane.b32.xlu0 %v580, 126
        %v586 = vpop.permute.xlu0 %585
        %v589 = vadd.f32 %v511, %v584
        %v590 = vadd.f32 %v512, %v586
        %v591 = vrot.slane %v390, 1
        %v592 = vrot.slane %v391, 1
        %v593 = vlaneseq
        %v594 = vshrl.u32 %v593, 7
        %vm595 = vcmp.lt.s32.totalorder %v594, 7
        %v596 = vsel %vm595, %v591, %v592
        %v597 = vsel %vm595, %v592, %v591
        %v598 = vstv %s219
        %v599 = vmul.f32 %v598, %v596
        %v600 = vmul.f32 %v598, %v597
        %v601 = vadd.f32 %v524, %v599
        %v602 = vadd.f32 %v525, %v600
        %v603 = vstv %s246
        %v604 = vmul.f32 %v603, %v596
        %v605 = vmul.f32 %v603, %v597
        %v606 = vadd.f32 %v537, %v604
        %v607 = vadd.f32 %v538, %v605
        %v608 = vstv %s273
        %v609 = vmul.f32 %v608, %v596
        %v610 = vmul.f32 %v608, %v597
        %v611 = vadd.f32 %v550, %v609
        %v612 = vadd.f32 %v551, %v610
        %v613 = vstv %s300
        %v614 = vmul.f32 %v613, %v596
        %v615 = vmul.f32 %v613, %v597
        %v616 = vadd.f32 %v563, %v614
        %v617 = vadd.f32 %v564, %v615
        %v618 = vstv %s327
        %v619 = vmul.f32 %v618, %v596
        %v620 = vmul.f32 %v618, %v597
        %v621 = vadd.f32 %v576, %v619
        %v622 = vadd.f32 %v577, %v620
        %v623 = vstv %s354
        %v624 = vmul.f32 %v623, %v596
        %v625 = vmul.f32 %v623, %v597
        %v626 = vadd.f32 %v589, %v624
        %v627 = vadd.f32 %v590, %v625
        %628 = vrot.lane.b32.xlu0 %v596, 16
        %v629 = vpop.permute.xlu0 %628
        %v630 = vsel %vm422, %v629, %v596
        %631 = vrot.lane.b32.xlu0 %v597, 16
        %v632 = vpop.permute.xlu0 %631
        %v633 = vsel %vm422, %v632, %v597
        %634 = vrot.lane.b32.xlu0 %v630, 16
        %v635 = vpop.permute.xlu0 %634
        %636 = vrot.lane.b32.xlu0 %v633, 16
        %v637 = vpop.permute.xlu0 %636
        %v638 = vsel %vm422, %v635, %v596
        %v639 = vsel %vm422, %v637, %v597
        %v640 = vstv %s220
        %v641 = vmul.f32 %v640, %v638
        %v642 = vmul.f32 %v640, %v639
        %645 = vrot.lane.b32.xlu0 %v641, 127
        %v646 = vpop.permute.xlu0 %645
        %647 = vrot.lane.b32.xlu0 %v642, 127
        %v648 = vpop.permute.xlu0 %647
        %v651 = vadd.f32 %v601, %v646
        %v652 = vadd.f32 %v602, %v648
        %v653 = vstv %s247
        %v654 = vmul.f32 %v653, %v638
        %v655 = vmul.f32 %v653, %v639
        %658 = vrot.lane.b32.xlu0 %v654, 127
        %v659 = vpop.permute.xlu0 %658
        %660 = vrot.lane.b32.xlu0 %v655, 127
        %v661 = vpop.permute.xlu0 %660
        %v664 = vadd.f32 %v606, %v659
        %v665 = vadd.f32 %v607, %v661
        %v666 = vstv %s274
        %v667 = vmul.f32 %v666, %v638
        %v668 = vmul.f32 %v666, %v639
        %671 = vrot.lane.b32.xlu0 %v667, 127
        %v672 = vpop.permute.xlu0 %671
        %673 = vrot.lane.b32.xlu0 %v668, 127
        %v674 = vpop.permute.xlu0 %673
        %v677 = vadd.f32 %v611, %v672
        %v678 = vadd.f32 %v612, %v674
        %v679 = vstv %s301
        %v680 = vmul.f32 %v679, %v638
        %v681 = vmul.f32 %v679, %v639
        %684 = vrot.lane.b32.xlu0 %v680, 127
        %v685 = vpop.permute.xlu0 %684
        %686 = vrot.lane.b32.xlu0 %v681, 127
        %v687 = vpop.permute.xlu0 %686
        %v690 = vadd.f32 %v616, %v685
        %v691 = vadd.f32 %v617, %v687
        %v692 = vstv %s328
        %v693 = vmul.f32 %v692, %v638
        %v694 = vmul.f32 %v692, %v639
        %697 = vrot.lane.b32.xlu0 %v693, 127
        %v698 = vpop.permute.xlu0 %697
        %699 = vrot.lane.b32.xlu0 %v694, 127
        %v700 = vpop.permute.xlu0 %699
        %v703 = vadd.f32 %v621, %v698
        %v704 = vadd.f32 %v622, %v700
        %v705 = vstv %s355
        %v706 = vmul.f32 %v705, %v638
        %v707 = vmul.f32 %v705, %v639
        %710 = vrot.lane.b32.xlu0 %v706, 127
        %v711 = vpop.permute.xlu0 %710
        %712 = vrot.lane.b32.xlu0 %v707, 127
        %v713 = vpop.permute.xlu0 %712
        %v716 = vadd.f32 %v626, %v711
        %v717 = vadd.f32 %v627, %v713
        %v718 = vstv %s221
        %v719 = vmul.f32 %v718, %v638
        %v720 = vmul.f32 %v718, %v639
        %723 = vrot.lane.b32.xlu0 %v719, 126
        %v724 = vpop.permute.xlu0 %723
        %725 = vrot.lane.b32.xlu0 %v720, 126
        %v726 = vpop.permute.xlu0 %725
        %v729 = vadd.f32 %v651, %v724
        %v730 = vadd.f32 %v652, %v726
        %v731 = vstv %s248
        %v732 = vmul.f32 %v731, %v638
        %v733 = vmul.f32 %v731, %v639
        %736 = vrot.lane.b32.xlu0 %v732, 126
        %v737 = vpop.permute.xlu0 %736
        %738 = vrot.lane.b32.xlu0 %v733, 126
        %v739 = vpop.permute.xlu0 %738
        %v742 = vadd.f32 %v664, %v737
        %v743 = vadd.f32 %v665, %v739
        %v744 = vstv %s275
        %v745 = vmul.f32 %v744, %v638
        %v746 = vmul.f32 %v744, %v639
        %749 = vrot.lane.b32.xlu0 %v745, 126
        %v750 = vpop.permute.xlu0 %749
        %751 = vrot.lane.b32.xlu0 %v746, 126
        %v752 = vpop.permute.xlu0 %751
        %v755 = vadd.f32 %v677, %v750
        %v756 = vadd.f32 %v678, %v752
        %v757 = vstv %s302
        %v758 = vmul.f32 %v757, %v638
        %v759 = vmul.f32 %v757, %v639
        %762 = vrot.lane.b32.xlu0 %v758, 126
        %v763 = vpop.permute.xlu0 %762
        %764 = vrot.lane.b32.xlu0 %v759, 126
        %v765 = vpop.permute.xlu0 %764
        %v768 = vadd.f32 %v690, %v763
        %v769 = vadd.f32 %v691, %v765
        %v770 = vstv %s329
        %v771 = vmul.f32 %v770, %v638
        %v772 = vmul.f32 %v770, %v639
        %775 = vrot.lane.b32.xlu0 %v771, 126
        %v776 = vpop.permute.xlu0 %775
        %777 = vrot.lane.b32.xlu0 %v772, 126
        %v778 = vpop.permute.xlu0 %777
        %v781 = vadd.f32 %v703, %v776
        %v782 = vadd.f32 %v704, %v778
        %v783 = vstv %s356
        %v784 = vmul.f32 %v783, %v638
        %v785 = vmul.f32 %v783, %v639
        %788 = vrot.lane.b32.xlu0 %v784, 126
        %v789 = vpop.permute.xlu0 %788
        %790 = vrot.lane.b32.xlu0 %v785, 126
        %v791 = vpop.permute.xlu0 %790
        %v794 = vadd.f32 %v716, %v789
        %v795 = vadd.f32 %v717, %v791
        %v796 = vrot.slane %v390, 2
        %v797 = vrot.slane %v391, 2
        %vm798 = vcmp.lt.s32.totalorder %v594, 6
        %v799 = vsel %vm798, %v796, %v797
        %v800 = vsel %vm798, %v797, %v796
        %v801 = vstv %s222
        %v802 = vmul.f32 %v801, %v799
        %v803 = vmul.f32 %v801, %v800
        %v804 = vadd.f32 %v729, %v802
        %v805 = vadd.f32 %v730, %v803
        %v806 = vstv %s249
        %v807 = vmul.f32 %v806, %v799
        %v808 = vmul.f32 %v806, %v800
        %v809 = vadd.f32 %v742, %v807
        %v810 = vadd.f32 %v743, %v808
        %v811 = vstv %s276
        %v812 = vmul.f32 %v811, %v799
        %v813 = vmul.f32 %v811, %v800
        %v814 = vadd.f32 %v755, %v812
        %v815 = vadd.f32 %v756, %v813
        %v816 = vstv %s303
        %v817 = vmul.f32 %v816, %v799
        %v818 = vmul.f32 %v816, %v800
        %v819 = vadd.f32 %v768, %v817
        %v820 = vadd.f32 %v769, %v818
        %v821 = vstv %s330
        %v822 = vmul.f32 %v821, %v799
        %v823 = vmul.f32 %v821, %v800
        %v824 = vadd.f32 %v781, %v822
        %v825 = vadd.f32 %v782, %v823
        %v826 = vstv %s357
        %v827 = vmul.f32 %v826, %v799
        %v828 = vmul.f32 %v826, %v800
        %v829 = vadd.f32 %v794, %v827
        %v830 = vadd.f32 %v795, %v828
        %831 = vrot.lane.b32.xlu0 %v799, 16
        %v832 = vpop.permute.xlu0 %831
        %v833 = vsel %vm422, %v832, %v799
        %834 = vrot.lane.b32.xlu0 %v800, 16
        %v835 = vpop.permute.xlu0 %834
        %v836 = vsel %vm422, %v835, %v800
        %837 = vrot.lane.b32.xlu0 %v833, 16
        %v838 = vpop.permute.xlu0 %837
        %839 = vrot.lane.b32.xlu0 %v836, 16
        %v840 = vpop.permute.xlu0 %839
        %v841 = vsel %vm422, %v838, %v799
        %v842 = vsel %vm422, %v840, %v800
        %v843 = vstv %s223
        %v844 = vmul.f32 %v843, %v841
        %v845 = vmul.f32 %v843, %v842
        %848 = vrot.lane.b32.xlu0 %v844, 127
        %v849 = vpop.permute.xlu0 %848
        %850 = vrot.lane.b32.xlu0 %v845, 127
        %v851 = vpop.permute.xlu0 %850
        %v854 = vadd.f32 %v804, %v849
        %v855 = vadd.f32 %v805, %v851
        %v856 = vstv %s250
        %v857 = vmul.f32 %v856, %v841
        %v858 = vmul.f32 %v856, %v842
        %861 = vrot.lane.b32.xlu0 %v857, 127
        %v862 = vpop.permute.xlu0 %861
        %863 = vrot.lane.b32.xlu0 %v858, 127
        %v864 = vpop.permute.xlu0 %863
        %v867 = vadd.f32 %v809, %v862
        %v868 = vadd.f32 %v810, %v864
        %v869 = vstv %s277
        %v870 = vmul.f32 %v869, %v841
        %v871 = vmul.f32 %v869, %v842
        %874 = vrot.lane.b32.xlu0 %v870, 127
        %v875 = vpop.permute.xlu0 %874
        %876 = vrot.lane.b32.xlu0 %v871, 127
        %v877 = vpop.permute.xlu0 %876
        %v880 = vadd.f32 %v814, %v875
        %v881 = vadd.f32 %v815, %v877
        %v882 = vstv %s304
        %v883 = vmul.f32 %v882, %v841
        %v884 = vmul.f32 %v882, %v842
        %887 = vrot.lane.b32.xlu0 %v883, 127
        %v888 = vpop.permute.xlu0 %887
        %889 = vrot.lane.b32.xlu0 %v884, 127
        %v890 = vpop.permute.xlu0 %889
        %v893 = vadd.f32 %v819, %v888
        %v894 = vadd.f32 %v820, %v890
        %v895 = vstv %s331
        %v896 = vmul.f32 %v895, %v841
        %v897 = vmul.f32 %v895, %v842
        %900 = vrot.lane.b32.xlu0 %v896, 127
        %v901 = vpop.permute.xlu0 %900
        %902 = vrot.lane.b32.xlu0 %v897, 127
        %v903 = vpop.permute.xlu0 %902
        %v906 = vadd.f32 %v824, %v901
        %v907 = vadd.f32 %v825, %v903
        %v908 = vstv %s358
        %v909 = vmul.f32 %v908, %v841
        %v910 = vmul.f32 %v908, %v842
        %913 = vrot.lane.b32.xlu0 %v909, 127
        %v914 = vpop.permute.xlu0 %913
        %915 = vrot.lane.b32.xlu0 %v910, 127
        %v916 = vpop.permute.xlu0 %915
        %v919 = vadd.f32 %v829, %v914
        %v920 = vadd.f32 %v830, %v916
        %v921 = vstv %s224
        %v922 = vmul.f32 %v921, %v841
        %v923 = vmul.f32 %v921, %v842
        %926 = vrot.lane.b32.xlu0 %v922, 126
        %v927 = vpop.permute.xlu0 %926
        %928 = vrot.lane.b32.xlu0 %v923, 126
        %v929 = vpop.permute.xlu0 %928
        %v932 = vadd.f32 %v854, %v927
        %v933 = vadd.f32 %v855, %v929
        %v934 = vstv %s251
        %v935 = vmul.f32 %v934, %v841
        %v936 = vmul.f32 %v934, %v842
        %939 = vrot.lane.b32.xlu0 %v935, 126
        %v940 = vpop.permute.xlu0 %939
        %941 = vrot.lane.b32.xlu0 %v936, 126
        %v942 = vpop.permute.xlu0 %941
        %v945 = vadd.f32 %v867, %v940
        %v946 = vadd.f32 %v868, %v942
        %v947 = vstv %s278
        %v948 = vmul.f32 %v947, %v841
        %v949 = vmul.f32 %v947, %v842
        %952 = vrot.lane.b32.xlu0 %v948, 126
        %v953 = vpop.permute.xlu0 %952
        %954 = vrot.lane.b32.xlu0 %v949, 126
        %v955 = vpop.permute.xlu0 %954
        %v958 = vadd.f32 %v880, %v953
        %v959 = vadd.f32 %v881, %v955
        %v960 = vstv %s305
        %v961 = vmul.f32 %v960, %v841
        %v962 = vmul.f32 %v960, %v842
        %965 = vrot.lane.b32.xlu0 %v961, 126
        %v966 = vpop.permute.xlu0 %965
        %967 = vrot.lane.b32.xlu0 %v962, 126
        %v968 = vpop.permute.xlu0 %967
        %v971 = vadd.f32 %v893, %v966
        %v972 = vadd.f32 %v894, %v968
        %v973 = vstv %s332
        %v974 = vmul.f32 %v973, %v841
        %v975 = vmul.f32 %v973, %v842
        %978 = vrot.lane.b32.xlu0 %v974, 126
        %v979 = vpop.permute.xlu0 %978
        %980 = vrot.lane.b32.xlu0 %v975, 126
        %v981 = vpop.permute.xlu0 %980
        %v984 = vadd.f32 %v906, %v979
        %v985 = vadd.f32 %v907, %v981
        %v986 = vstv %s359
        %v987 = vmul.f32 %v986, %v841
        %v988 = vmul.f32 %v986, %v842
        %991 = vrot.lane.b32.xlu0 %v987, 126
        %v992 = vpop.permute.xlu0 %991
        %993 = vrot.lane.b32.xlu0 %v988, 126
        %v994 = vpop.permute.xlu0 %993
        %v997 = vadd.f32 %v919, %v992
        %v998 = vadd.f32 %v920, %v994
        %s999 = scalar_lea.vmem %s184, 16 [#allocation2]
        %v1000 = vld [vmem:[%s999] sm:$0xff]
        %v1001 = vld [vmem:[%s999 + $0x8] sm:$0xff]
        %v1002 = vstv %s225
        %v1003 = vmul.f32 %v1002, %v1000
        %v1004 = vmul.f32 %v1002, %v1001
        %v1005 = vadd.f32 %v932, %v1003
        %v1006 = vadd.f32 %v933, %v1004
        %v1007 = vstv %s252
        %v1008 = vmul.f32 %v1007, %v1000
        %v1009 = vmul.f32 %v1007, %v1001
        %v1010 = vadd.f32 %v945, %v1008
        %v1011 = vadd.f32 %v946, %v1009
        %v1012 = vstv %s279
        %v1013 = vmul.f32 %v1012, %v1000
        %v1014 = vmul.f32 %v1012, %v1001
        %v1015 = vadd.f32 %v958, %v1013
        %v1016 = vadd.f32 %v959, %v1014
        %v1017 = vstv %s306
        %v1018 = vmul.f32 %v1017, %v1000
        %v1019 = vmul.f32 %v1017, %v1001
        %v1020 = vadd.f32 %v971, %v1018
        %v1021 = vadd.f32 %v972, %v1019
        %v1022 = vstv %s333
        %v1023 = vmul.f32 %v1022, %v1000
        %v1024 = vmul.f32 %v1022, %v1001
        %v1025 = vadd.f32 %v984, %v1023
        %v1026 = vadd.f32 %v985, %v1024
        %v1027 = vstv %s360
        %v1028 = vmul.f32 %v1027, %v1000
        %v1029 = vmul.f32 %v1027, %v1001
        %v1030 = vadd.f32 %v997, %v1028
        %v1031 = vadd.f32 %v998, %v1029
        %1032 = vrot.lane.b32.xlu0 %v1000, 16
        %v1033 = vpop.permute.xlu0 %1032
        %v1034 = vsel %vm422, %v1033, %v1000
        %1035 = vrot.lane.b32.xlu0 %v1001, 16
        %v1036 = vpop.permute.xlu0 %1035
        %v1037 = vsel %vm422, %v1036, %v1001
        %1038 = vrot.lane.b32.xlu0 %v1034, 16
        %v1039 = vpop.permute.xlu0 %1038
        %1040 = vrot.lane.b32.xlu0 %v1037, 16
        %v1041 = vpop.permute.xlu0 %1040
        %v1042 = vsel %vm422, %v1039, %v1000
        %v1043 = vsel %vm422, %v1041, %v1001
        %v1044 = vstv %s226
        %v1045 = vmul.f32 %v1044, %v1042
        %v1046 = vmul.f32 %v1044, %v1043
        %1049 = vrot.lane.b32.xlu0 %v1045, 127
        %v1050 = vpop.permute.xlu0 %1049
        %1051 = vrot.lane.b32.xlu0 %v1046, 127
        %v1052 = vpop.permute.xlu0 %1051
        %v1055 = vadd.f32 %v1005, %v1050
        %v1056 = vadd.f32 %v1006, %v1052
        %v1057 = vstv %s253
        %v1058 = vmul.f32 %v1057, %v1042
        %v1059 = vmul.f32 %v1057, %v1043
        %1062 = vrot.lane.b32.xlu0 %v1058, 127
        %v1063 = vpop.permute.xlu0 %1062
        %1064 = vrot.lane.b32.xlu0 %v1059, 127
        %v1065 = vpop.permute.xlu0 %1064
        %v1068 = vadd.f32 %v1010, %v1063
        %v1069 = vadd.f32 %v1011, %v1065
        %v1070 = vstv %s280
        %v1071 = vmul.f32 %v1070, %v1042
        %v1072 = vmul.f32 %v1070, %v1043
        %1075 = vrot.lane.b32.xlu0 %v1071, 127
        %v1076 = vpop.permute.xlu0 %1075
        %1077 = vrot.lane.b32.xlu0 %v1072, 127
        %v1078 = vpop.permute.xlu0 %1077
        %v1081 = vadd.f32 %v1015, %v1076
        %v1082 = vadd.f32 %v1016, %v1078
        %v1083 = vstv %s307
        %v1084 = vmul.f32 %v1083, %v1042
        %v1085 = vmul.f32 %v1083, %v1043
        %1088 = vrot.lane.b32.xlu0 %v1084, 127
        %v1089 = vpop.permute.xlu0 %1088
        %1090 = vrot.lane.b32.xlu0 %v1085, 127
        %v1091 = vpop.permute.xlu0 %1090
        %v1094 = vadd.f32 %v1020, %v1089
        %v1095 = vadd.f32 %v1021, %v1091
        %v1096 = vstv %s334
        %v1097 = vmul.f32 %v1096, %v1042
        %v1098 = vmul.f32 %v1096, %v1043
        %1101 = vrot.lane.b32.xlu0 %v1097, 127
        %v1102 = vpop.permute.xlu0 %1101
        %1103 = vrot.lane.b32.xlu0 %v1098, 127
        %v1104 = vpop.permute.xlu0 %1103
        %v1107 = vadd.f32 %v1025, %v1102
        %v1108 = vadd.f32 %v1026, %v1104
        %v1109 = vstv %s361
        %v1110 = vmul.f32 %v1109, %v1042
        %v1111 = vmul.f32 %v1109, %v1043
        %1114 = vrot.lane.b32.xlu0 %v1110, 127
        %v1115 = vpop.permute.xlu0 %1114
        %1116 = vrot.lane.b32.xlu0 %v1111, 127
        %v1117 = vpop.permute.xlu0 %1116
        %v1120 = vadd.f32 %v1030, %v1115
        %v1121 = vadd.f32 %v1031, %v1117
        %v1122 = vstv %s227
        %v1123 = vmul.f32 %v1122, %v1042
        %v1124 = vmul.f32 %v1122, %v1043
        %1127 = vrot.lane.b32.xlu0 %v1123, 126
        %v1128 = vpop.permute.xlu0 %1127
        %1129 = vrot.lane.b32.xlu0 %v1124, 126
        %v1130 = vpop.permute.xlu0 %1129
        %v1133 = vadd.f32 %v1055, %v1128
        %v1134 = vadd.f32 %v1056, %v1130
        %v1135 = vstv %s254
        %v1136 = vmul.f32 %v1135, %v1042
        %v1137 = vmul.f32 %v1135, %v1043
        %1140 = vrot.lane.b32.xlu0 %v1136, 126
        %v1141 = vpop.permute.xlu0 %1140
        %1142 = vrot.lane.b32.xlu0 %v1137, 126
        %v1143 = vpop.permute.xlu0 %1142
        %v1146 = vadd.f32 %v1068, %v1141
        %v1147 = vadd.f32 %v1069, %v1143
        %v1148 = vstv %s281
        %v1149 = vmul.f32 %v1148, %v1042
        %v1150 = vmul.f32 %v1148, %v1043
        %1153 = vrot.lane.b32.xlu0 %v1149, 126
        %v1154 = vpop.permute.xlu0 %1153
        %1155 = vrot.lane.b32.xlu0 %v1150, 126
        %v1156 = vpop.permute.xlu0 %1155
        %v1159 = vadd.f32 %v1081, %v1154
        %v1160 = vadd.f32 %v1082, %v1156
        %v1161 = vstv %s308
        %v1162 = vmul.f32 %v1161, %v1042
        %v1163 = vmul.f32 %v1161, %v1043
        %1166 = vrot.lane.b32.xlu0 %v1162, 126
        %v1167 = vpop.permute.xlu0 %1166
        %1168 = vrot.lane.b32.xlu0 %v1163, 126
        %v1169 = vpop.permute.xlu0 %1168
        %v1172 = vadd.f32 %v1094, %v1167
        %v1173 = vadd.f32 %v1095, %v1169
        %v1174 = vstv %s335
        %v1175 = vmul.f32 %v1174, %v1042
        %v1176 = vmul.f32 %v1174, %v1043
        %1179 = vrot.lane.b32.xlu0 %v1175, 126
        %v1180 = vpop.permute.xlu0 %1179
        %1181 = vrot.lane.b32.xlu0 %v1176, 126
        %v1182 = vpop.permute.xlu0 %1181
        %v1185 = vadd.f32 %v1107, %v1180
        %v1186 = vadd.f32 %v1108, %v1182
        %v1187 = vstv %s362
        %v1188 = vmul.f32 %v1187, %v1042
        %v1189 = vmul.f32 %v1187, %v1043
        %1192 = vrot.lane.b32.xlu0 %v1188, 126
        %v1193 = vpop.permute.xlu0 %1192
        %1194 = vrot.lane.b32.xlu0 %v1189, 126
        %v1195 = vpop.permute.xlu0 %1194
        %v1198 = vadd.f32 %v1120, %v1193
        %v1199 = vadd.f32 %v1121, %v1195
        %v1200 = vrot.slane %v1000, 1
        %v1201 = vrot.slane %v1001, 1
        %v1202 = vsel %vm595, %v1200, %v1201
        %v1203 = vsel %vm595, %v1201, %v1200
        %v1204 = vstv %s228
        %v1205 = vmul.f32 %v1204, %v1202
        %v1206 = vmul.f32 %v1204, %v1203
        %v1207 = vadd.f32 %v1133, %v1205
        %v1208 = vadd.f32 %v1134, %v1206
        %v1209 = vstv %s255
        %v1210 = vmul.f32 %v1209, %v1202
        %v1211 = vmul.f32 %v1209, %v1203
        %v1212 = vadd.f32 %v1146, %v1210
        %v1213 = vadd.f32 %v1147, %v1211
        %v1214 = vstv %s282
        %v1215 = vmul.f32 %v1214, %v1202
        %v1216 = vmul.f32 %v1214, %v1203
        %v1217 = vadd.f32 %v1159, %v1215
        %v1218 = vadd.f32 %v1160, %v1216
        %v1219 = vstv %s309
        %v1220 = vmul.f32 %v1219, %v1202
        %v1221 = vmul.f32 %v1219, %v1203
        %v1222 = vadd.f32 %v1172, %v1220
        %v1223 = vadd.f32 %v1173, %v1221
        %v1224 = vstv %s336
        %v1225 = vmul.f32 %v1224, %v1202
        %v1226 = vmul.f32 %v1224, %v1203
        %v1227 = vadd.f32 %v1185, %v1225
        %v1228 = vadd.f32 %v1186, %v1226
        %v1229 = vstv %s363
        %v1230 = vmul.f32 %v1229, %v1202
        %v1231 = vmul.f32 %v1229, %v1203
        %v1232 = vadd.f32 %v1198, %v1230
        %v1233 = vadd.f32 %v1199, %v1231
        %1234 = vrot.lane.b32.xlu0 %v1202, 16
        %v1235 = vpop.permute.xlu0 %1234
        %v1236 = vsel %vm422, %v1235, %v1202
        %1237 = vrot.lane.b32.xlu0 %v1203, 16
        %v1238 = vpop.permute.xlu0 %1237
        %v1239 = vsel %vm422, %v1238, %v1203
        %1240 = vrot.lane.b32.xlu0 %v1236, 16
        %v1241 = vpop.permute.xlu0 %1240
        %1242 = vrot.lane.b32.xlu0 %v1239, 16
        %v1243 = vpop.permute.xlu0 %1242
        %v1244 = vsel %vm422, %v1241, %v1202
        %v1245 = vsel %vm422, %v1243, %v1203
        %v1246 = vstv %s229
        %v1247 = vmul.f32 %v1246, %v1244
        %v1248 = vmul.f32 %v1246, %v1245
        %1251 = vrot.lane.b32.xlu0 %v1247, 127
        %v1252 = vpop.permute.xlu0 %1251
        %1253 = vrot.lane.b32.xlu0 %v1248, 127
        %v1254 = vpop.permute.xlu0 %1253
        %v1257 = vadd.f32 %v1207, %v1252
        %v1258 = vadd.f32 %v1208, %v1254
        %v1259 = vstv %s256
        %v1260 = vmul.f32 %v1259, %v1244
        %v1261 = vmul.f32 %v1259, %v1245
        %1264 = vrot.lane.b32.xlu0 %v1260, 127
        %v1265 = vpop.permute.xlu0 %1264
        %1266 = vrot.lane.b32.xlu0 %v1261, 127
        %v1267 = vpop.permute.xlu0 %1266
        %v1270 = vadd.f32 %v1212, %v1265
        %v1271 = vadd.f32 %v1213, %v1267
        %v1272 = vstv %s283
        %v1273 = vmul.f32 %v1272, %v1244
        %v1274 = vmul.f32 %v1272, %v1245
        %1277 = vrot.lane.b32.xlu0 %v1273, 127
        %v1278 = vpop.permute.xlu0 %1277
        %1279 = vrot.lane.b32.xlu0 %v1274, 127
        %v1280 = vpop.permute.xlu0 %1279
        %v1283 = vadd.f32 %v1217, %v1278
        %v1284 = vadd.f32 %v1218, %v1280
        %v1285 = vstv %s310
        %v1286 = vmul.f32 %v1285, %v1244
        %v1287 = vmul.f32 %v1285, %v1245
        %1290 = vrot.lane.b32.xlu0 %v1286, 127
        %v1291 = vpop.permute.xlu0 %1290
        %1292 = vrot.lane.b32.xlu0 %v1287, 127
        %v1293 = vpop.permute.xlu0 %1292
        %v1296 = vadd.f32 %v1222, %v1291
        %v1297 = vadd.f32 %v1223, %v1293
        %v1298 = vstv %s337
        %v1299 = vmul.f32 %v1298, %v1244
        %v1300 = vmul.f32 %v1298, %v1245
        %1303 = vrot.lane.b32.xlu0 %v1299, 127
        %v1304 = vpop.permute.xlu0 %1303
        %1305 = vrot.lane.b32.xlu0 %v1300, 127
        %v1306 = vpop.permute.xlu0 %1305
        %v1309 = vadd.f32 %v1227, %v1304
        %v1310 = vadd.f32 %v1228, %v1306
        %v1311 = vstv %s364
        %v1312 = vmul.f32 %v1311, %v1244
        %v1313 = vmul.f32 %v1311, %v1245
        %1316 = vrot.lane.b32.xlu0 %v1312, 127
        %v1317 = vpop.permute.xlu0 %1316
        %1318 = vrot.lane.b32.xlu0 %v1313, 127
        %v1319 = vpop.permute.xlu0 %1318
        %v1322 = vadd.f32 %v1232, %v1317
        %v1323 = vadd.f32 %v1233, %v1319
        %v1324 = vstv %s230
        %v1325 = vmul.f32 %v1324, %v1244
        %v1326 = vmul.f32 %v1324, %v1245
        %1329 = vrot.lane.b32.xlu0 %v1325, 126
        %v1330 = vpop.permute.xlu0 %1329
        %1331 = vrot.lane.b32.xlu0 %v1326, 126
        %v1332 = vpop.permute.xlu0 %1331
        %v1335 = vadd.f32 %v1257, %v1330
        %v1336 = vadd.f32 %v1258, %v1332
        %v1337 = vstv %s257
        %v1338 = vmul.f32 %v1337, %v1244
        %v1339 = vmul.f32 %v1337, %v1245
        %1342 = vrot.lane.b32.xlu0 %v1338, 126
        %v1343 = vpop.permute.xlu0 %1342
        %1344 = vrot.lane.b32.xlu0 %v1339, 126
        %v1345 = vpop.permute.xlu0 %1344
        %v1348 = vadd.f32 %v1270, %v1343
        %v1349 = vadd.f32 %v1271, %v1345
        %v1350 = vstv %s284
        %v1351 = vmul.f32 %v1350, %v1244
        %v1352 = vmul.f32 %v1350, %v1245
        %1355 = vrot.lane.b32.xlu0 %v1351, 126
        %v1356 = vpop.permute.xlu0 %1355
        %1357 = vrot.lane.b32.xlu0 %v1352, 126
        %v1358 = vpop.permute.xlu0 %1357
        %v1361 = vadd.f32 %v1283, %v1356
        %v1362 = vadd.f32 %v1284, %v1358
        %v1363 = vstv %s311
        %v1364 = vmul.f32 %v1363, %v1244
        %v1365 = vmul.f32 %v1363, %v1245
        %1368 = vrot.lane.b32.xlu0 %v1364, 126
        %v1369 = vpop.permute.xlu0 %1368
        %1370 = vrot.lane.b32.xlu0 %v1365, 126
        %v1371 = vpop.permute.xlu0 %1370
        %v1374 = vadd.f32 %v1296, %v1369
        %v1375 = vadd.f32 %v1297, %v1371
        %v1376 = vstv %s338
        %v1377 = vmul.f32 %v1376, %v1244
        %v1378 = vmul.f32 %v1376, %v1245
        %1381 = vrot.lane.b32.xlu0 %v1377, 126
        %v1382 = vpop.permute.xlu0 %1381
        %1383 = vrot.lane.b32.xlu0 %v1378, 126
        %v1384 = vpop.permute.xlu0 %1383
        %v1387 = vadd.f32 %v1309, %v1382
        %v1388 = vadd.f32 %v1310, %v1384
        %v1389 = vstv %s365
        %v1390 = vmul.f32 %v1389, %v1244
        %v1391 = vmul.f32 %v1389, %v1245
        %1394 = vrot.lane.b32.xlu0 %v1390, 126
        %v1395 = vpop.permute.xlu0 %1394
        %1396 = vrot.lane.b32.xlu0 %v1391, 126
        %v1397 = vpop.permute.xlu0 %1396
        %v1400 = vadd.f32 %v1322, %v1395
        %v1401 = vadd.f32 %v1323, %v1397
        %v1402 = vrot.slane %v1000, 2
        %v1403 = vrot.slane %v1001, 2
        %v1404 = vsel %vm798, %v1402, %v1403
        %v1405 = vsel %vm798, %v1403, %v1402
        %v1406 = vstv %s231
        %v1407 = vmul.f32 %v1406, %v1404
        %v1408 = vmul.f32 %v1406, %v1405
        %v1409 = vadd.f32 %v1335, %v1407
        %v1410 = vadd.f32 %v1336, %v1408
        %v1411 = vstv %s258
        %v1412 = vmul.f32 %v1411, %v1404
        %v1413 = vmul.f32 %v1411, %v1405
        %v1414 = vadd.f32 %v1348, %v1412
        %v1415 = vadd.f32 %v1349, %v1413
        %v1416 = vstv %s285
        %v1417 = vmul.f32 %v1416, %v1404
        %v1418 = vmul.f32 %v1416, %v1405
        %v1419 = vadd.f32 %v1361, %v1417
        %v1420 = vadd.f32 %v1362, %v1418
        %v1421 = vstv %s312
        %v1422 = vmul.f32 %v1421, %v1404
        %v1423 = vmul.f32 %v1421, %v1405
        %v1424 = vadd.f32 %v1374, %v1422
        %v1425 = vadd.f32 %v1375, %v1423
        %v1426 = vstv %s339
        %v1427 = vmul.f32 %v1426, %v1404
        %v1428 = vmul.f32 %v1426, %v1405
        %v1429 = vadd.f32 %v1387, %v1427
        %v1430 = vadd.f32 %v1388, %v1428
        %v1431 = vstv %s366
        %v1432 = vmul.f32 %v1431, %v1404
        %v1433 = vmul.f32 %v1431, %v1405
        %v1434 = vadd.f32 %v1400, %v1432
        %v1435 = vadd.f32 %v1401, %v1433
        %1436 = vrot.lane.b32.xlu0 %v1404, 16
        %v1437 = vpop.permute.xlu0 %1436
        %v1438 = vsel %vm422, %v1437, %v1404
        %1439 = vrot.lane.b32.xlu0 %v1405, 16
        %v1440 = vpop.permute.xlu0 %1439
        %v1441 = vsel %vm422, %v1440, %v1405
        %1442 = vrot.lane.b32.xlu0 %v1438, 16
        %v1443 = vpop.permute.xlu0 %1442
        %1444 = vrot.lane.b32.xlu0 %v1441, 16
        %v1445 = vpop.permute.xlu0 %1444
        %v1446 = vsel %vm422, %v1443, %v1404
        %v1447 = vsel %vm422, %v1445, %v1405
        %v1448 = vstv %s232
        %v1449 = vmul.f32 %v1448, %v1446
        %v1450 = vmul.f32 %v1448, %v1447
        %1453 = vrot.lane.b32.xlu0 %v1449, 127
        %v1454 = vpop.permute.xlu0 %1453
        %1455 = vrot.lane.b32.xlu0 %v1450, 127
        %v1456 = vpop.permute.xlu0 %1455
        %v1459 = vadd.f32 %v1409, %v1454
        %v1460 = vadd.f32 %v1410, %v1456
        %v1461 = vstv %s259
        %v1462 = vmul.f32 %v1461, %v1446
        %v1463 = vmul.f32 %v1461, %v1447
        %1466 = vrot.lane.b32.xlu0 %v1462, 127
        %v1467 = vpop.permute.xlu0 %1466
        %1468 = vrot.lane.b32.xlu0 %v1463, 127
        %v1469 = vpop.permute.xlu0 %1468
        %v1472 = vadd.f32 %v1414, %v1467
        %v1473 = vadd.f32 %v1415, %v1469
        %v1474 = vstv %s286
        %v1475 = vmul.f32 %v1474, %v1446
        %v1476 = vmul.f32 %v1474, %v1447
        %1479 = vrot.lane.b32.xlu0 %v1475, 127
        %v1480 = vpop.permute.xlu0 %1479
        %1481 = vrot.lane.b32.xlu0 %v1476, 127
        %v1482 = vpop.permute.xlu0 %1481
        %v1485 = vadd.f32 %v1419, %v1480
        %v1486 = vadd.f32 %v1420, %v1482
        %v1487 = vstv %s313
        %v1488 = vmul.f32 %v1487, %v1446
        %v1489 = vmul.f32 %v1487, %v1447
        %1492 = vrot.lane.b32.xlu0 %v1488, 127
        %v1493 = vpop.permute.xlu0 %1492
        %1494 = vrot.lane.b32.xlu0 %v1489, 127
        %v1495 = vpop.permute.xlu0 %1494
        %v1498 = vadd.f32 %v1424, %v1493
        %v1499 = vadd.f32 %v1425, %v1495
        %v1500 = vstv %s340
        %v1501 = vmul.f32 %v1500, %v1446
        %v1502 = vmul.f32 %v1500, %v1447
        %1505 = vrot.lane.b32.xlu0 %v1501, 127
        %v1506 = vpop.permute.xlu0 %1505
        %1507 = vrot.lane.b32.xlu0 %v1502, 127
        %v1508 = vpop.permute.xlu0 %1507
        %v1511 = vadd.f32 %v1429, %v1506
        %v1512 = vadd.f32 %v1430, %v1508
        %v1513 = vstv %s367
        %v1514 = vmul.f32 %v1513, %v1446
        %v1515 = vmul.f32 %v1513, %v1447
        %1518 = vrot.lane.b32.xlu0 %v1514, 127
        %v1519 = vpop.permute.xlu0 %1518
        %1520 = vrot.lane.b32.xlu0 %v1515, 127
        %v1521 = vpop.permute.xlu0 %1520
        %v1524 = vadd.f32 %v1434, %v1519
        %v1525 = vadd.f32 %v1435, %v1521
        %v1526 = vstv %s233
        %v1527 = vmul.f32 %v1526, %v1446
        %v1528 = vmul.f32 %v1526, %v1447
        %1531 = vrot.lane.b32.xlu0 %v1527, 126
        %v1532 = vpop.permute.xlu0 %1531
        %1533 = vrot.lane.b32.xlu0 %v1528, 126
        %v1534 = vpop.permute.xlu0 %1533
        %v1537 = vadd.f32 %v1459, %v1532
        %v1538 = vadd.f32 %v1460, %v1534
        %v1539 = vstv %s260
        %v1540 = vmul.f32 %v1539, %v1446
        %v1541 = vmul.f32 %v1539, %v1447
        %1544 = vrot.lane.b32.xlu0 %v1540, 126
        %v1545 = vpop.permute.xlu0 %1544
        %1546 = vrot.lane.b32.xlu0 %v1541, 126
        %v1547 = vpop.permute.xlu0 %1546
        %v1550 = vadd.f32 %v1472, %v1545
        %v1551 = vadd.f32 %v1473, %v1547
        %v1552 = vstv %s287
        %v1553 = vmul.f32 %v1552, %v1446
        %v1554 = vmul.f32 %v1552, %v1447
        %1557 = vrot.lane.b32.xlu0 %v1553, 126
        %v1558 = vpop.permute.xlu0 %1557
        %1559 = vrot.lane.b32.xlu0 %v1554, 126
        %v1560 = vpop.permute.xlu0 %1559
        %v1563 = vadd.f32 %v1485, %v1558
        %v1564 = vadd.f32 %v1486, %v1560
        %v1565 = vstv %s314
        %v1566 = vmul.f32 %v1565, %v1446
        %v1567 = vmul.f32 %v1565, %v1447
        %1570 = vrot.lane.b32.xlu0 %v1566, 126
        %v1571 = vpop.permute.xlu0 %1570
        %1572 = vrot.lane.b32.xlu0 %v1567, 126
        %v1573 = vpop.permute.xlu0 %1572
        %v1576 = vadd.f32 %v1498, %v1571
        %v1577 = vadd.f32 %v1499, %v1573
        %v1578 = vstv %s341
        %v1579 = vmul.f32 %v1578, %v1446
        %v1580 = vmul.f32 %v1578, %v1447
        %1583 = vrot.lane.b32.xlu0 %v1579, 126
        %v1584 = vpop.permute.xlu0 %1583
        %1585 = vrot.lane.b32.xlu0 %v1580, 126
        %v1586 = vpop.permute.xlu0 %1585
        %v1589 = vadd.f32 %v1511, %v1584
        %v1590 = vadd.f32 %v1512, %v1586
        %v1591 = vstv %s368
        %v1592 = vmul.f32 %v1591, %v1446
        %v1593 = vmul.f32 %v1591, %v1447
        %1596 = vrot.lane.b32.xlu0 %v1592, 126
        %v1597 = vpop.permute.xlu0 %1596
        %1598 = vrot.lane.b32.xlu0 %v1593, 126
        %v1599 = vpop.permute.xlu0 %1598
        %v1602 = vadd.f32 %v1524, %v1597
        %v1603 = vadd.f32 %v1525, %v1599
        %s1604 = scalar_lea.vmem %s184, 32 [#allocation2]
        %v1605 = vld [vmem:[%s1604] sm:$0xff]
        %v1606 = vld [vmem:[%s1604 + $0x8] sm:$0xff]
        %v1607 = vstv %s234
        %v1608 = vmul.f32 %v1607, %v1605
        %v1609 = vmul.f32 %v1607, %v1606
        %v1610 = vadd.f32 %v1537, %v1608
        %v1611 = vadd.f32 %v1538, %v1609
        %v1612 = vstv %s261
        %v1613 = vmul.f32 %v1612, %v1605
        %v1614 = vmul.f32 %v1612, %v1606
        %v1615 = vadd.f32 %v1550, %v1613
        %v1616 = vadd.f32 %v1551, %v1614
        %v1617 = vstv %s288
        %v1618 = vmul.f32 %v1617, %v1605
        %v1619 = vmul.f32 %v1617, %v1606
        %v1620 = vadd.f32 %v1563, %v1618
        %v1621 = vadd.f32 %v1564, %v1619
        %v1622 = vstv %s315
        %v1623 = vmul.f32 %v1622, %v1605
        %v1624 = vmul.f32 %v1622, %v1606
        %v1625 = vadd.f32 %v1576, %v1623
        %v1626 = vadd.f32 %v1577, %v1624
        %v1627 = vstv %s342
        %v1628 = vmul.f32 %v1627, %v1605
        %v1629 = vmul.f32 %v1627, %v1606
        %v1630 = vadd.f32 %v1589, %v1628
        %v1631 = vadd.f32 %v1590, %v1629
        %v1632 = vstv %s369
        %v1633 = vmul.f32 %v1632, %v1605
        %v1634 = vmul.f32 %v1632, %v1606
        %v1635 = vadd.f32 %v1602, %v1633
        %v1636 = vadd.f32 %v1603, %v1634
        %1637 = vrot.lane.b32.xlu0 %v1605, 16
        %v1638 = vpop.permute.xlu0 %1637
        %v1639 = vsel %vm422, %v1638, %v1605
        %1640 = vrot.lane.b32.xlu0 %v1606, 16
        %v1641 = vpop.permute.xlu0 %1640
        %v1642 = vsel %vm422, %v1641, %v1606
        %1643 = vrot.lane.b32.xlu0 %v1639, 16
        %v1644 = vpop.permute.xlu0 %1643
        %1645 = vrot.lane.b32.xlu0 %v1642, 16
        %v1646 = vpop.permute.xlu0 %1645
        %v1647 = vsel %vm422, %v1644, %v1605
        %v1648 = vsel %vm422, %v1646, %v1606
        %v1649 = vstv %s235
        %v1650 = vmul.f32 %v1649, %v1647
        %v1651 = vmul.f32 %v1649, %v1648
        %1654 = vrot.lane.b32.xlu0 %v1650, 127
        %v1655 = vpop.permute.xlu0 %1654
        %1656 = vrot.lane.b32.xlu0 %v1651, 127
        %v1657 = vpop.permute.xlu0 %1656
        %v1660 = vadd.f32 %v1610, %v1655
        %v1661 = vadd.f32 %v1611, %v1657
        %v1662 = vstv %s262
        %v1663 = vmul.f32 %v1662, %v1647
        %v1664 = vmul.f32 %v1662, %v1648
        %1667 = vrot.lane.b32.xlu0 %v1663, 127
        %v1668 = vpop.permute.xlu0 %1667
        %1669 = vrot.lane.b32.xlu0 %v1664, 127
        %v1670 = vpop.permute.xlu0 %1669
        %v1673 = vadd.f32 %v1615, %v1668
        %v1674 = vadd.f32 %v1616, %v1670
        %v1675 = vstv %s289
        %v1676 = vmul.f32 %v1675, %v1647
        %v1677 = vmul.f32 %v1675, %v1648
        %1680 = vrot.lane.b32.xlu0 %v1676, 127
        %v1681 = vpop.permute.xlu0 %1680
        %1682 = vrot.lane.b32.xlu0 %v1677, 127
        %v1683 = vpop.permute.xlu0 %1682
        %v1686 = vadd.f32 %v1620, %v1681
        %v1687 = vadd.f32 %v1621, %v1683
        %v1688 = vstv %s316
        %v1689 = vmul.f32 %v1688, %v1647
        %v1690 = vmul.f32 %v1688, %v1648
        %1693 = vrot.lane.b32.xlu0 %v1689, 127
        %v1694 = vpop.permute.xlu0 %1693
        %1695 = vrot.lane.b32.xlu0 %v1690, 127
        %v1696 = vpop.permute.xlu0 %1695
        %v1699 = vadd.f32 %v1625, %v1694
        %v1700 = vadd.f32 %v1626, %v1696
        %v1701 = vstv %s343
        %v1702 = vmul.f32 %v1701, %v1647
        %v1703 = vmul.f32 %v1701, %v1648
        %1706 = vrot.lane.b32.xlu0 %v1702, 127
        %v1707 = vpop.permute.xlu0 %1706
        %1708 = vrot.lane.b32.xlu0 %v1703, 127
        %v1709 = vpop.permute.xlu0 %1708
        %v1712 = vadd.f32 %v1630, %v1707
        %v1713 = vadd.f32 %v1631, %v1709
        %v1714 = vstv %s370
        %v1715 = vmul.f32 %v1714, %v1647
        %v1716 = vmul.f32 %v1714, %v1648
        %1719 = vrot.lane.b32.xlu0 %v1715, 127
        %v1720 = vpop.permute.xlu0 %1719
        %1721 = vrot.lane.b32.xlu0 %v1716, 127
        %v1722 = vpop.permute.xlu0 %1721
        %v1725 = vadd.f32 %v1635, %v1720
        %v1726 = vadd.f32 %v1636, %v1722
        %v1727 = vstv %s236
        %v1728 = vmul.f32 %v1727, %v1647
        %v1729 = vmul.f32 %v1727, %v1648
        %1732 = vrot.lane.b32.xlu0 %v1728, 126
        %v1733 = vpop.permute.xlu0 %1732
        %1734 = vrot.lane.b32.xlu0 %v1729, 126
        %v1735 = vpop.permute.xlu0 %1734
        %v1738 = vadd.f32 %v1660, %v1733
        %v1739 = vadd.f32 %v1661, %v1735
        %v1740 = vstv %s263
        %v1741 = vmul.f32 %v1740, %v1647
        %v1742 = vmul.f32 %v1740, %v1648
        %1745 = vrot.lane.b32.xlu0 %v1741, 126
        %v1746 = vpop.permute.xlu0 %1745
        %1747 = vrot.lane.b32.xlu0 %v1742, 126
        %v1748 = vpop.permute.xlu0 %1747
        %v1751 = vadd.f32 %v1673, %v1746
        %v1752 = vadd.f32 %v1674, %v1748
        %v1753 = vstv %s290
        %v1754 = vmul.f32 %v1753, %v1647
        %v1755 = vmul.f32 %v1753, %v1648
        %1758 = vrot.lane.b32.xlu0 %v1754, 126
        %v1759 = vpop.permute.xlu0 %1758
        %1760 = vrot.lane.b32.xlu0 %v1755, 126
        %v1761 = vpop.permute.xlu0 %1760
        %v1764 = vadd.f32 %v1686, %v1759
        %v1765 = vadd.f32 %v1687, %v1761
        %v1766 = vstv %s317
        %v1767 = vmul.f32 %v1766, %v1647
        %v1768 = vmul.f32 %v1766, %v1648
        %1771 = vrot.lane.b32.xlu0 %v1767, 126
        %v1772 = vpop.permute.xlu0 %1771
        %1773 = vrot.lane.b32.xlu0 %v1768, 126
        %v1774 = vpop.permute.xlu0 %1773
        %v1777 = vadd.f32 %v1699, %v1772
        %v1778 = vadd.f32 %v1700, %v1774
        %v1779 = vstv %s344
        %v1780 = vmul.f32 %v1779, %v1647
        %v1781 = vmul.f32 %v1779, %v1648
        %1784 = vrot.lane.b32.xlu0 %v1780, 126
        %v1785 = vpop.permute.xlu0 %1784
        %1786 = vrot.lane.b32.xlu0 %v1781, 126
        %v1787 = vpop.permute.xlu0 %1786
        %v1790 = vadd.f32 %v1712, %v1785
        %v1791 = vadd.f32 %v1713, %v1787
        %v1792 = vstv %s371
        %v1793 = vmul.f32 %v1792, %v1647
        %v1794 = vmul.f32 %v1792, %v1648
        %1797 = vrot.lane.b32.xlu0 %v1793, 126
        %v1798 = vpop.permute.xlu0 %1797
        %1799 = vrot.lane.b32.xlu0 %v1794, 126
        %v1800 = vpop.permute.xlu0 %1799
        %v1803 = vadd.f32 %v1725, %v1798
        %v1804 = vadd.f32 %v1726, %v1800
        %v1805 = vrot.slane %v1605, 1
        %v1806 = vrot.slane %v1606, 1
        %v1807 = vsel %vm595, %v1805, %v1806
        %v1808 = vsel %vm595, %v1806, %v1805
        %v1809 = vstv %s237
        %v1810 = vmul.f32 %v1809, %v1807
        %v1811 = vmul.f32 %v1809, %v1808
        %v1812 = vadd.f32 %v1738, %v1810
        %v1813 = vadd.f32 %v1739, %v1811
        %v1814 = vstv %s264
        %v1815 = vmul.f32 %v1814, %v1807
        %v1816 = vmul.f32 %v1814, %v1808
        %v1817 = vadd.f32 %v1751, %v1815
        %v1818 = vadd.f32 %v1752, %v1816
        %v1819 = vstv %s291
        %v1820 = vmul.f32 %v1819, %v1807
        %v1821 = vmul.f32 %v1819, %v1808
        %v1822 = vadd.f32 %v1764, %v1820
        %v1823 = vadd.f32 %v1765, %v1821
        %v1824 = vstv %s318
        %v1825 = vmul.f32 %v1824, %v1807
        %v1826 = vmul.f32 %v1824, %v1808
        %v1827 = vadd.f32 %v1777, %v1825
        %v1828 = vadd.f32 %v1778, %v1826
        %v1829 = vstv %s345
        %v1830 = vmul.f32 %v1829, %v1807
        %v1831 = vmul.f32 %v1829, %v1808
        %v1832 = vadd.f32 %v1790, %v1830
        %v1833 = vadd.f32 %v1791, %v1831
        %v1834 = vstv %s372
        %v1835 = vmul.f32 %v1834, %v1807
        %v1836 = vmul.f32 %v1834, %v1808
        %v1837 = vadd.f32 %v1803, %v1835
        %v1838 = vadd.f32 %v1804, %v1836
        %1839 = vrot.lane.b32.xlu0 %v1807, 16
        %v1840 = vpop.permute.xlu0 %1839
        %v1841 = vsel %vm422, %v1840, %v1807
        %1842 = vrot.lane.b32.xlu0 %v1808, 16
        %v1843 = vpop.permute.xlu0 %1842
        %v1844 = vsel %vm422, %v1843, %v1808
        %1845 = vrot.lane.b32.xlu0 %v1841, 16
        %v1846 = vpop.permute.xlu0 %1845
        %1847 = vrot.lane.b32.xlu0 %v1844, 16
        %v1848 = vpop.permute.xlu0 %1847
        %v1849 = vsel %vm422, %v1846, %v1807
        %v1850 = vsel %vm422, %v1848, %v1808
        %v1851 = vstv %s238
        %v1852 = vmul.f32 %v1851, %v1849
        %v1853 = vmul.f32 %v1851, %v1850
        %1856 = vrot.lane.b32.xlu0 %v1852, 127
        %v1857 = vpop.permute.xlu0 %1856
        %1858 = vrot.lane.b32.xlu0 %v1853, 127
        %v1859 = vpop.permute.xlu0 %1858
        %v1862 = vadd.f32 %v1812, %v1857
        %v1863 = vadd.f32 %v1813, %v1859
        %v1864 = vstv %s265
        %v1865 = vmul.f32 %v1864, %v1849
        %v1866 = vmul.f32 %v1864, %v1850
        %1869 = vrot.lane.b32.xlu0 %v1865, 127
        %v1870 = vpop.permute.xlu0 %1869
        %1871 = vrot.lane.b32.xlu0 %v1866, 127
        %v1872 = vpop.permute.xlu0 %1871
        %v1875 = vadd.f32 %v1817, %v1870
        %v1876 = vadd.f32 %v1818, %v1872
        %v1877 = vstv %s292
        %v1878 = vmul.f32 %v1877, %v1849
        %v1879 = vmul.f32 %v1877, %v1850
        %1882 = vrot.lane.b32.xlu0 %v1878, 127
        %v1883 = vpop.permute.xlu0 %1882
        %1884 = vrot.lane.b32.xlu0 %v1879, 127
        %v1885 = vpop.permute.xlu0 %1884
        %v1888 = vadd.f32 %v1822, %v1883
        %v1889 = vadd.f32 %v1823, %v1885
        %v1890 = vstv %s319
        %v1891 = vmul.f32 %v1890, %v1849
        %v1892 = vmul.f32 %v1890, %v1850
        %1895 = vrot.lane.b32.xlu0 %v1891, 127
        %v1896 = vpop.permute.xlu0 %1895
        %1897 = vrot.lane.b32.xlu0 %v1892, 127
        %v1898 = vpop.permute.xlu0 %1897
        %v1901 = vadd.f32 %v1827, %v1896
        %v1902 = vadd.f32 %v1828, %v1898
        %v1903 = vstv %s346
        %v1904 = vmul.f32 %v1903, %v1849
        %v1905 = vmul.f32 %v1903, %v1850
        %1908 = vrot.lane.b32.xlu0 %v1904, 127
        %v1909 = vpop.permute.xlu0 %1908
        %1910 = vrot.lane.b32.xlu0 %v1905, 127
        %v1911 = vpop.permute.xlu0 %1910
        %v1914 = vadd.f32 %v1832, %v1909
        %v1915 = vadd.f32 %v1833, %v1911
        %v1916 = vstv %s373
        %v1917 = vmul.f32 %v1916, %v1849
        %v1918 = vmul.f32 %v1916, %v1850
        %1921 = vrot.lane.b32.xlu0 %v1917, 127
        %v1922 = vpop.permute.xlu0 %1921
        %1923 = vrot.lane.b32.xlu0 %v1918, 127
        %v1924 = vpop.permute.xlu0 %1923
        %v1927 = vadd.f32 %v1837, %v1922
        %v1928 = vadd.f32 %v1838, %v1924
        %v1929 = vstv %s239
        %v1930 = vmul.f32 %v1929, %v1849
        %v1931 = vmul.f32 %v1929, %v1850
        %1934 = vrot.lane.b32.xlu0 %v1930, 126
        %v1935 = vpop.permute.xlu0 %1934
        %1936 = vrot.lane.b32.xlu0 %v1931, 126
        %v1937 = vpop.permute.xlu0 %1936
        %v1940 = vadd.f32 %v1862, %v1935
        %v1941 = vadd.f32 %v1863, %v1937
        %v1942 = vstv %s266
        %v1943 = vmul.f32 %v1942, %v1849
        %v1944 = vmul.f32 %v1942, %v1850
        %1947 = vrot.lane.b32.xlu0 %v1943, 126
        %v1948 = vpop.permute.xlu0 %1947
        %1949 = vrot.lane.b32.xlu0 %v1944, 126
        %v1950 = vpop.permute.xlu0 %1949
        %v1953 = vadd.f32 %v1875, %v1948
        %v1954 = vadd.f32 %v1876, %v1950
        %v1955 = vstv %s293
        %v1956 = vmul.f32 %v1955, %v1849
        %v1957 = vmul.f32 %v1955, %v1850
        %1960 = vrot.lane.b32.xlu0 %v1956, 126
        %v1961 = vpop.permute.xlu0 %1960
        %1962 = vrot.lane.b32.xlu0 %v1957, 126
        %v1963 = vpop.permute.xlu0 %1962
        %v1966 = vadd.f32 %v1888, %v1961
        %v1967 = vadd.f32 %v1889, %v1963
        %v1968 = vstv %s320
        %v1969 = vmul.f32 %v1968, %v1849
        %v1970 = vmul.f32 %v1968, %v1850
        %1973 = vrot.lane.b32.xlu0 %v1969, 126
        %v1974 = vpop.permute.xlu0 %1973
        %1975 = vrot.lane.b32.xlu0 %v1970, 126
        %v1976 = vpop.permute.xlu0 %1975
        %v1979 = vadd.f32 %v1901, %v1974
        %v1980 = vadd.f32 %v1902, %v1976
        %v1981 = vstv %s347
        %v1982 = vmul.f32 %v1981, %v1849
        %v1983 = vmul.f32 %v1981, %v1850
        %1986 = vrot.lane.b32.xlu0 %v1982, 126
        %v1987 = vpop.permute.xlu0 %1986
        %1988 = vrot.lane.b32.xlu0 %v1983, 126
        %v1989 = vpop.permute.xlu0 %1988
        %v1992 = vadd.f32 %v1914, %v1987
        %v1993 = vadd.f32 %v1915, %v1989
        %v1994 = vstv %s374
        %v1995 = vmul.f32 %v1994, %v1849
        %v1996 = vmul.f32 %v1994, %v1850
        %1999 = vrot.lane.b32.xlu0 %v1995, 126
        %v2000 = vpop.permute.xlu0 %1999
        %2001 = vrot.lane.b32.xlu0 %v1996, 126
        %v2002 = vpop.permute.xlu0 %2001
        %v2005 = vadd.f32 %v1927, %v2000
        %v2006 = vadd.f32 %v1928, %v2002
        %v2007 = vrot.slane %v1605, 2
        %v2008 = vrot.slane %v1606, 2
        %v2009 = vsel %vm798, %v2007, %v2008
        %v2010 = vsel %vm798, %v2008, %v2007
        %v2011 = vstv %s240
        %v2012 = vmul.f32 %v2011, %v2009
        %v2013 = vmul.f32 %v2011, %v2010
        %v2014 = vadd.f32 %v1940, %v2012
        %v2015 = vadd.f32 %v1941, %v2013
        %v2016 = vstv %s267
        %v2017 = vmul.f32 %v2016, %v2009
        %v2018 = vmul.f32 %v2016, %v2010
        %v2019 = vadd.f32 %v1953, %v2017
        %v2020 = vadd.f32 %v1954, %v2018
        %v2021 = vstv %s294
        %v2022 = vmul.f32 %v2021, %v2009
        %v2023 = vmul.f32 %v2021, %v2010
        %v2024 = vadd.f32 %v1966, %v2022
        %v2025 = vadd.f32 %v1967, %v2023
        %v2026 = vstv %s321
        %v2027 = vmul.f32 %v2026, %v2009
        %v2028 = vmul.f32 %v2026, %v2010
        %v2029 = vadd.f32 %v1979, %v2027
        %v2030 = vadd.f32 %v1980, %v2028
        %v2031 = vstv %s348
        %v2032 = vmul.f32 %v2031, %v2009
        %v2033 = vmul.f32 %v2031, %v2010
        %v2034 = vadd.f32 %v1992, %v2032
        %v2035 = vadd.f32 %v1993, %v2033
        %v2036 = vstv %s375
        %v2037 = vmul.f32 %v2036, %v2009
        %v2038 = vmul.f32 %v2036, %v2010
        %v2039 = vadd.f32 %v2005, %v2037
        %v2040 = vadd.f32 %v2006, %v2038
        %2041 = vrot.lane.b32.xlu0 %v2009, 16
        %v2042 = vpop.permute.xlu0 %2041
        %v2043 = vsel %vm422, %v2042, %v2009
        %2044 = vrot.lane.b32.xlu0 %v2010, 16
        %v2045 = vpop.permute.xlu0 %2044
        %v2046 = vsel %vm422, %v2045, %v2010
        %2047 = vrot.lane.b32.xlu0 %v2043, 16
        %v2048 = vpop.permute.xlu0 %2047
        %2049 = vrot.lane.b32.xlu0 %v2046, 16
        %v2050 = vpop.permute.xlu0 %2049
        %v2051 = vsel %vm422, %v2048, %v2009
        %v2052 = vsel %vm422, %v2050, %v2010
        %v2053 = vstv %s241
        %v2054 = vmul.f32 %v2053, %v2051
        %v2055 = vmul.f32 %v2053, %v2052
        %2058 = vrot.lane.b32.xlu0 %v2054, 127
        %v2059 = vpop.permute.xlu0 %2058
        %2060 = vrot.lane.b32.xlu0 %v2055, 127
        %v2061 = vpop.permute.xlu0 %2060
        %v2064 = vadd.f32 %v2014, %v2059
        %v2065 = vadd.f32 %v2015, %v2061
        %v2066 = vstv %s268
        %v2067 = vmul.f32 %v2066, %v2051
        %v2068 = vmul.f32 %v2066, %v2052
        %2071 = vrot.lane.b32.xlu0 %v2067, 127
        %v2072 = vpop.permute.xlu0 %2071
        %2073 = vrot.lane.b32.xlu0 %v2068, 127
        %v2074 = vpop.permute.xlu0 %2073
        %v2077 = vadd.f32 %v2019, %v2072
        %v2078 = vadd.f32 %v2020, %v2074
        %v2079 = vstv %s295
        %v2080 = vmul.f32 %v2079, %v2051
        %v2081 = vmul.f32 %v2079, %v2052
        %2084 = vrot.lane.b32.xlu0 %v2080, 127
        %v2085 = vpop.permute.xlu0 %2084
        %2086 = vrot.lane.b32.xlu0 %v2081, 127
        %v2087 = vpop.permute.xlu0 %2086
        %v2090 = vadd.f32 %v2024, %v2085
        %v2091 = vadd.f32 %v2025, %v2087
        %v2092 = vstv %s322
        %v2093 = vmul.f32 %v2092, %v2051
        %v2094 = vmul.f32 %v2092, %v2052
        %2097 = vrot.lane.b32.xlu0 %v2093, 127
        %v2098 = vpop.permute.xlu0 %2097
        %2099 = vrot.lane.b32.xlu0 %v2094, 127
        %v2100 = vpop.permute.xlu0 %2099
        %v2103 = vadd.f32 %v2029, %v2098
        %v2104 = vadd.f32 %v2030, %v2100
        %v2105 = vstv %s349
        %v2106 = vmul.f32 %v2105, %v2051
        %v2107 = vmul.f32 %v2105, %v2052
        %2110 = vrot.lane.b32.xlu0 %v2106, 127
        %v2111 = vpop.permute.xlu0 %2110
        %2112 = vrot.lane.b32.xlu0 %v2107, 127
        %v2113 = vpop.permute.xlu0 %2112
        %v2116 = vadd.f32 %v2034, %v2111
        %v2117 = vadd.f32 %v2035, %v2113
        %v2118 = vstv %s376
        %v2119 = vmul.f32 %v2118, %v2051
        %v2120 = vmul.f32 %v2118, %v2052
        %2123 = vrot.lane.b32.xlu0 %v2119, 127
        %v2124 = vpop.permute.xlu0 %2123
        %2125 = vrot.lane.b32.xlu0 %v2120, 127
        %v2126 = vpop.permute.xlu0 %2125
        %v2129 = vadd.f32 %v2039, %v2124
        %v2130 = vadd.f32 %v2040, %v2126
        %v2131 = vstv %s242
        %v2132 = vmul.f32 %v2131, %v2051
        %v2133 = vmul.f32 %v2131, %v2052
        %2136 = vrot.lane.b32.xlu0 %v2132, 126
        %v2137 = vpop.permute.xlu0 %2136
        %2138 = vrot.lane.b32.xlu0 %v2133, 126
        %v2139 = vpop.permute.xlu0 %2138
        %v2142 = vadd.f32 %v2064, %v2137
        %v2143 = vadd.f32 %v2065, %v2139
        %v2144 = vstv %s269
        %v2145 = vmul.f32 %v2144, %v2051
        %v2146 = vmul.f32 %v2144, %v2052
        %2149 = vrot.lane.b32.xlu0 %v2145, 126
        %v2150 = vpop.permute.xlu0 %2149
        %2151 = vrot.lane.b32.xlu0 %v2146, 126
        %v2152 = vpop.permute.xlu0 %2151
        %v2155 = vadd.f32 %v2077, %v2150
        %v2156 = vadd.f32 %v2078, %v2152
        %v2157 = vstv %s296
        %v2158 = vmul.f32 %v2157, %v2051
        %v2159 = vmul.f32 %v2157, %v2052
        %2162 = vrot.lane.b32.xlu0 %v2158, 126
        %v2163 = vpop.permute.xlu0 %2162
        %2164 = vrot.lane.b32.xlu0 %v2159, 126
        %v2165 = vpop.permute.xlu0 %2164
        %v2168 = vadd.f32 %v2090, %v2163
        %v2169 = vadd.f32 %v2091, %v2165
        %v2170 = vstv %s323
        %v2171 = vmul.f32 %v2170, %v2051
        %v2172 = vmul.f32 %v2170, %v2052
        %2175 = vrot.lane.b32.xlu0 %v2171, 126
        %v2176 = vpop.permute.xlu0 %2175
        %2177 = vrot.lane.b32.xlu0 %v2172, 126
        %v2178 = vpop.permute.xlu0 %2177
        %v2181 = vadd.f32 %v2103, %v2176
        %v2182 = vadd.f32 %v2104, %v2178
        %v2183 = vstv %s350
        %v2184 = vmul.f32 %v2183, %v2051
        %v2185 = vmul.f32 %v2183, %v2052
        %2188 = vrot.lane.b32.xlu0 %v2184, 126
        %v2189 = vpop.permute.xlu0 %2188
        %2190 = vrot.lane.b32.xlu0 %v2185, 126
        %v2191 = vpop.permute.xlu0 %2190
        %v2194 = vadd.f32 %v2116, %v2189
        %v2195 = vadd.f32 %v2117, %v2191
        %v2196 = vstv %s377
        %v2197 = vmul.f32 %v2196, %v2051
        %v2198 = vmul.f32 %v2196, %v2052
        %2201 = vrot.lane.b32.xlu0 %v2197, 126
        %v2202 = vpop.permute.xlu0 %2201
        %2203 = vrot.lane.b32.xlu0 %v2198, 126
        %v2204 = vpop.permute.xlu0 %2203
        %v2207 = vadd.f32 %v2129, %v2202
        %v2208 = vadd.f32 %v2130, %v2204
        %vm2209 = vcmask 130048
        %2210 = vst.msk [vmem:[%s215] sm:$0xff] %vm2209, %v2142
        %2211 = vst.msk [vmem:[%s215 + $0x8] sm:$0xff] %vm2209, %v2143
        %s2212 = scalar_lea.vmem %s215, 16 [#allocation9]
        %2213 = vst.msk [vmem:[%s2212] sm:$0xff] %vm2209, %v2155
        %2214 = vst.msk [vmem:[%s2212 + $0x8] sm:$0xff] %vm2209, %v2156
        %s2215 = scalar_lea.vmem %s215, 32 [#allocation9]
        %2216 = vst.msk [vmem:[%s2215] sm:$0xff] %vm2209, %v2168
        %2217 = vst.msk [vmem:[%s2215 + $0x8] sm:$0xff] %vm2209, %v2169
        %s2218 = scalar_lea.vmem %s215, 48 [#allocation9]
        %2219 = vst.msk [vmem:[%s2218] sm:$0xff] %vm2209, %v2181
        %2220 = vst.msk [vmem:[%s2218 + $0x8] sm:$0xff] %vm2209, %v2182
        %s2221 = scalar_lea.vmem %s215, 64 [#allocation9]
        %2222 = vst.msk [vmem:[%s2221] sm:$0xff] %vm2209, %v2194
        %2223 = vst.msk [vmem:[%s2221 + $0x8] sm:$0xff] %vm2209, %v2195
        %s2224 = scalar_lea.vmem %s215, 80 [#allocation9]
        %2225 = vst.msk [vmem:[%s2224] sm:$0xff] %vm2209, %v2207
        %2226 = vst.msk [vmem:[%s2224 + $0x8] sm:$0xff] %vm2209, %v2208
        %s2227 = sand.u32 %s98, 1
        %s2228 = scalar_lea.sflag [#allocation4], %s2227
        %s2229 = sand.u32 %s98, 1
        %s2230 = smul.addr %s2229, 96
        %s2231 = scalar_lea.vmem [#allocation9], %s2230
        // Predicated region
        $region45: #{tpu_custom_call.1} parent=31 // pred_check
          %p2232 = pneg %p108
        $region46: #{tpu_custom_call.1} parent=31 // pred_check_branch
          %2234 = sbr.rel (%p2232) target = $region48
        $region47: #{tpu_custom_call.1} parent=31 // pred_region
          %s2236 = ssub.s32 1536, 1536
          %2237 = vsyncadd %s2228, %s2236
          %s2238 = smul.addr %s22, 12
          %s2239 = smul.addr %s2238, 128
          %s2240 = scalar_lea.hbm %s3, %s2239
          %s2241 = sshll.u32 %s2231, 4
          %s2242 = int_to_ptr.vmem [resolvable:$true] %s2241
          %2247 = dma.vmem_to_hbm [thread:$0]  %s2242, 1536, %s2240, %s2228, 128, 128, 8
        $region48: #{tpu_custom_call.1} parent=31 // pred_fallthru
          _
      $region32: #{tpu_custom_call.1} parent=5 // pred_fallthru
        _
      %p2248 = scmp.le.s32.totalorder 2, %s17
      // Predicated region
      $region49: #{tpu_custom_call.1} parent=5 // pred_check
        %p2249 = pneg %p2248
      $region50: #{tpu_custom_call.1} parent=5 // pred_check_branch
        %2251 = sbr.rel (%p2249) target = $region52
      $region51: #{tpu_custom_call.1} parent=5 // pred_region
        %s2252 = ssub.s32 %s17, 2
        // Predicated region
        $region53: #{tpu_custom_call.1} parent=51 // pred_check
          %p2253 = pneg %p114
        $region54: #{tpu_custom_call.1} parent=51 // pred_check_branch
          %2255 = sbr.rel (%p2253) target = $region56
        $region55: #{tpu_custom_call.1} parent=51 // pred_region
          %s2256 = sand.u32 %s99, 1
          %s2257 = scalar_lea.sflag [#allocation4], %s2256
          %s2258 = sand.u32 %s99, 1
          %s2259 = smul.addr %s2258, 96
          %s2260 = scalar_lea.vmem [#allocation9], %s2259
          %2261 = dma.done %s2257, 1536
        $region56: #{tpu_custom_call.1} parent=51 // pred_fallthru
          _
      $region52: #{tpu_custom_call.1} parent=5 // pred_fallthru
        _
    $region6: #{tpu_custom_call.1} parent=1 // loop_footer
      %s21 = sadd.s32 1, %s17
    $region7: #{tpu_custom_call.1} parent=1 // loop_footer_branch
      %16 = sbr.rel target = $region3
    $region8: #{tpu_custom_call.1} parent=1 // loop_exit
      _
    %2262 = vsyncpa [#allocation3], 1
    %s2263 = scalar_lea.sflag [#allocation3], 1
    %2264 = vsyncpa %s2263, 1
    %2265 = vsyncpa [#allocation4], 1
    %s2266 = scalar_lea.sflag [#allocation4], 1
    %2267 = vsyncpa %s2266, 1
    %2268 = vsyncpa [#allocation5], 1
    %s2269 = scalar_lea.sflag [#allocation5], 1
    %2270 = vsyncpa %s2269, 1
    %2271 = vsyncpa [#allocation8], 1

</llo_original>
